<compile_context>
chip_gen: v7x
topology: tpu7x:2x2x1
jax: 0.10.0
libtpu: 0.0.40
codegen_flags: <defaults>
</compile_context>

<pallas_src>
import functools

import jax
import jax.numpy as jnp
from jax.experimental import pallas as pl
from jax.experimental.pallas import tpu as pltpu


_INV_SQRT2 = 0.7071067811865476
_NEG_BIG = 1e30  # finite "-inf" so that 0 * mask never produces NaN


def _gelu_exact(x):
    # torch.nn.functional.gelu default (approximate='none', erf based)
    return 0.5 * x * (1.0 + jax.lax.erf(x * _INV_SQRT2))


# --------------------------------- kernel ------------------------------------

def action_coarse_stack_kernel(x_ref, w32_ref, w128_ref, bias_ref, const_ref,
                               o_ref, act_ref, *, num_heads, compute_dtype):
    layer = pl.program_id(0)
    rows, d = x_ref.shape                 # (B*F, D)
    inner = w128_ref.shape[0] // 2        # GEGLU inner dim
    nh = num_heads
    n_exp = const_ref.shape[0]            # B*H*F expanded-key axis
    cd = compute_dtype

    def mm(a, w):
        return jnp.dot(a.astype(cd), w.astype(cd),
                       preferred_element_type=jnp.float32)

    def mm_nt(a, b):  # a @ b.T without materializing the transpose
        return jax.lax.dot_general(a.astype(cd), b.astype(cd),
                                   (((1,), (1,)), ((), ())),
                                   preferred_element_type=jnp.float32)

    def geglu(v, w1, b1, w2, b2):
        h = mm(v, w1) + b1
        return mm(h[:, 0:inner] * _gelu_exact(h[:, inner:2 * inner]), w2) + b2

    # ---- per-layer parameter views (all slices start on aligned boundaries) ----
    ffin_w1 = w32_ref[:, 0:2 * inner]
    ff_w1 = w32_ref[:, 2 * inner:4 * inner]
    wqkv = w32_ref[:, 4 * inner:4 * inner + 4 * d]          # [Wq*scale|Wk|Wv|0]
    wo = w32_ref[:, 4 * inner + 4 * d:4 * inner + 5 * d]
    ffin_w2 = w128_ref[0:inner, :]
    ff_w2 = w128_ref[inner:2 * inner, :]
    ffin_b1 = bias_ref[0:1, :]
    ff_b1 = bias_ref[1:2, :]
    ffin_b2 = bias_ref[2:3, 0:d]
    bo = bias_ref[3:4, 0:d]
    ln_g = bias_ref[4:5, 0:d]
    ln_b = bias_ref[5:6, 0:d]
    ff_b2 = bias_ref[6:7, 0:d]
    qkv_b = bias_ref[7:8, 0:4 * d]                           # [0|0|0|1] -> ones cols

    # ---- constants shared by every layer (DMA'd once) ----
    expmask = const_ref[:, 0:4 * d]                          # head-channel mask, x4
    emat = const_ref[:, 4 * d:4 * d + rows]                  # (N, rows) expansion
    batch_b = const_ref[0:rows, 8 * d:8 * d + n_exp]         # 0 / -1e30 batch bias
    ho = const_ref[rows:rows + nh, 8 * d:8 * d + n_exp]      # (H, N) head one-hots

    # ---- activation carry across the layer grid ----
    @pl.when(layer == 0)
    def _():
        act_ref[...] = x_ref[...]

    x = act_ref[...]                                          # (rows, D) f32

    # ---- ff_in : GEGLU feed-forward ----
    hid = geglu(x, ffin_w1, ffin_b1, ffin_w2, ffin_b2)

    # ---- attn1 : de-batched, loop-free multi-head self-attention ----
    qkvo = mm(hid, wqkv) + qkv_b                              # (rows, 4D): q|k|v|1
    q = qkvo[:, 0:d]
    xkv = mm(emat, qkvo) * expmask                            # (N, 4D) expanded+masked
    k_exp = xkv[:, d:2 * d]                                   # (N, D)
    v_aug = xkv[:, 2 * d:4 * d]                               # (N, 2D): v_exp | head mask

    s = mm_nt(q, k_exp) + batch_b                             # (rows, N) f32 scores

    # per-head max (matches reference per-head softmax; robust to underflow)
    m = jnp.zeros_like(s)
    for h in range(nh):
        oh = ho[h:h + 1, :]
        mh = jnp.max(s * oh - (1.0 - oh) * _NEG_BIG, axis=-1, keepdims=True)
        m = m + oh * mh
    p = jnp.exp(s - m)                                        # cross-batch lanes -> 0

    u = mm(p, v_aug)                                          # (rows, 2D)
    den = u[:, d:2 * d]                                       # per-head denom per chan
    r = pl.reciprocal(den, approx=True)                       # EUP slot
    r = r * (2.0 - den * r)                                   # one Newton step
    attn = u[:, 0:d] * r
    hid = hid + mm(attn, wo) + bo

    # ---- attn2: cross_attention_dim=None -> skipped ----

    # ---- norm3 : LayerNorm(eps=1e-5), f32 ----
    mu = jnp.mean(hid, axis=-1, keepdims=True)
    var = jnp.mean((hid - mu) ** 2, axis=-1, keepdims=True)
    hn = (hid - mu) * jax.lax.rsqrt(var + 1e-5) * ln_g + ln_b

    # ---- ff : GEGLU feed-forward ----
    y = geglu(hn, ff_w1, ff_b1, ff_w2, ff_b2)

    act_ref[...] = y
    o_ref[...] = y


# ------------------------------ packing / wrapper -----------------------------

def pack_layer_params(p, d, num_heads, weight_dtype):
    """One layer -> (w32 (D, 4*inner+8D), w128 (2*inner, D), bias (8, 2*inner))."""
    inner = p["ffin_w2"].shape[0]
    dh = d // num_heads
    scale = 1.0 / float(dh) ** 0.5
    wqkv_ext = jnp.concatenate(
        [p["wq"] * scale, p["wk"], p["wv"], jnp.zeros((d, d), jnp.float32)], axis=1)
    wo_ext = jnp.concatenate([p["wo"], jnp.zeros((d, 3 * d), jnp.float32)], axis=1)
    w32 = jnp.concatenate([p["ffin_w1"], p["ff_w1"], wqkv_ext, wo_ext],
                          axis=1).astype(weight_dtype)
    w128 = jnp.concatenate([p["ffin_w2"], p["ff_w2"]], axis=0).astype(weight_dtype)

    width = 2 * inner
    assert width >= 4 * d
    qkv_b = jnp.concatenate([jnp.zeros((1, 3 * d), jnp.float32),
                             jnp.ones((1, d), jnp.float32)], axis=1)

    def row(v):
        v = jnp.asarray(v, jnp.float32).reshape(1, -1)
        return jnp.pad(v, ((0, 0), (0, width - v.shape[1])))

    bias = jnp.concatenate(
        [row(p["ffin_b1"]), row(p["ff_b1"]), row(p["ffin_b2"]), row(p["bo"]),
         row(p["ln_g"]), row(p["ln_b"]), row(p["ff_b2"]), row(qkv_b)],
        axis=0)                                               # (8, 2*inner) f32
    return w32, w128, bias


def make_constants(bsz, f, d, nh):
    """Layer-independent masks, packed into one aligned f32 slab."""
    rows = bsz * f
    n_exp = bsz * nh * f
    dh = d // nh
    assert d % nh == 0 and rows <= 4 * d and n_exp >= rows + nh

    n = jnp.arange(n_exp)
    n_batch = n // (nh * f)
    n_head = (n % (nh * f)) // f
    n_src = n_batch * f + (n % f)

    emat = (n_src[:, None] == jnp.arange(rows)[None, :]).astype(jnp.float32)
    hm = (n_head[:, None] == (jnp.arange(d)[None, :] // dh)).astype(jnp.float32)
    expmask = jnp.tile(hm, (1, 4))
    r_batch = jnp.arange(rows) // f
    batch_bias = jnp.where(r_batch[:, None] == n_batch[None, :],
                           0.0, -_NEG_BIG).astype(jnp.float32)
    head_onehot = (jnp.arange(nh)[:, None] == n_head[None, :]).astype(jnp.float32)

    width = ((8 * d + n_exp + 127) // 128) * 128
    c = jnp.zeros((n_exp, width), jnp.float32)
    c = c.at[:, 0:4 * d].set(expmask)
    c = c.at[:, 4 * d:4 * d + rows].set(emat)
    c = c.at[0:rows, 8 * d:8 * d + n_exp].set(batch_bias)
    c = c.at[rows:rows + nh, 8 * d:8 * d + n_exp].set(head_onehot)
    return c


def action_coarse_stack_forward(x, params_list, *, num_heads,
                                compute_dtype=jnp.bfloat16):
    """x: (B, F, D) f32 -> (B, F, D) f32; applies len(params_list) layers.

    compute_dtype controls the weight-slab storage dtype and MXU operand dtype
    (bf16 is the fast path on v5e/v6e/v7x); softmax/LN/GELU stay f32.
    """
    b, f, d = x.shape
    num_layers = len(params_list)
    slabs = [pack_layer_params(p, d, num_heads, compute_dtype) for p in params_list]
    w32 = jnp.stack([s[0] for s in slabs], axis=0)
    w128 = jnp.stack([s[1] for s in slabs], axis=0)
    bias = jnp.stack([s[2] for s in slabs], axis=0)
    const = make_constants(b, f, d, num_heads)
    x2 = x.reshape(b * f, d).astype(jnp.float32)

    kernel = functools.partial(action_coarse_stack_kernel,
                               num_heads=num_heads, compute_dtype=compute_dtype)

    out2 = pl.pallas_call(
        kernel,
        out_shape=jax.ShapeDtypeStruct((b * f, d), jnp.float32),
        grid_spec=pltpu.PrefetchScalarGridSpec(
            num_scalar_prefetch=0,
            grid=(num_layers,),                       # layer loop, activation resident
            in_specs=[
                pl.BlockSpec((b * f, d), lambda l: (0, 0)),                # x (once)
                pl.BlockSpec((None,) + w32.shape[1:], lambda l: (l, 0, 0)),
                pl.BlockSpec((None,) + w128.shape[1:], lambda l: (l, 0, 0)),
                pl.BlockSpec((None,) + bias.shape[1:], lambda l: (l, 0, 0)),
                pl.BlockSpec(const.shape, lambda l: (0, 0)),               # const (once)
            ],
            out_specs=pl.BlockSpec((b * f, d), lambda l: (0, 0)),
            scratch_shapes=[pltpu.VMEM((b * f, d), jnp.float32)],          # activation
        ),
        compiler_params=pltpu.CompilerParams(dimension_semantics=("arbitrary",)),
    )(x2, w32, w128, bias, const)
    return out2.reshape(b, f, d)


# ------------------------------- param init -----------------------------------

def init_params(key, dim, mult=4):
    inner = dim * mult
    ks = jax.random.split(key, 13)

    def lin_w(k, fan_in, fan_out):
        bound = 1.0 / (fan_in ** 0.5)
        return jax.random.uniform(k, (fan_in, fan_out), jnp.float32, -bound, bound)

    def lin_b(k, fan_in, fan_out):
        bound = 1.0 / (fan_in ** 0.5)
        return jax.random.uniform(k, (1, fan_out), jnp.float32, -bound, bound)

    return {
        # ff_in : GEGLU proj (dim -> 2*inner) + out proj (inner -> dim)
        "ffin_w1": lin_w(ks[0], dim, 2 * inner), "ffin_b1": lin_b(ks[1], dim, 2 * inner),
        "ffin_w2": lin_w(ks[2], inner, dim), "ffin_b2": lin_b(ks[3], inner, dim),
        # attn1 : to_q/to_k/to_v (no bias), to_out (with bias)
        "wq": lin_w(ks[4], dim, dim), "wk": lin_w(ks[5], dim, dim),
        "wv": lin_w(ks[6], dim, dim), "wo": lin_w(ks[7], dim, dim),
        "bo": lin_b(ks[8], dim, dim),
        # norm3
        "ln_g": jnp.ones((1, dim), jnp.float32), "ln_b": jnp.zeros((1, dim), jnp.float32),
        # ff : GEGLU proj + out proj
        "ff_w1": lin_w(ks[9], dim, 2 * inner), "ff_b1": lin_b(ks[10], dim, 2 * inner),
        "ff_w2": lin_w(ks[11], inner, dim), "ff_b2": lin_b(ks[12], inner, dim),
    }


# ----------------------------- pure-JAX reference ------------------------------

def ref_layer(x, p, *, num_heads):
    b, f, d = x.shape
    dh = d // num_heads
    scale = 1.0 / float(dh) ** 0.5

    def geglu(v, w1, b1, w2, b2):
        inner = w2.shape[0]
        h = v @ w1 + b1
        return (h[..., :inner] * _gelu_exact(h[..., inner:])) @ w2 + b2

    h = geglu(x, p["ffin_w1"], p["ffin_b1"], p["ffin_w2"], p["ffin_b2"])
    q = (h @ p["wq"]).reshape(b, f, num_heads, dh)
    k = (h @ p["wk"]).reshape(b, f, num_heads, dh)
    v = (h @ p["wv"]).reshape(b, f, num_heads, dh)
    s = jnp.einsum("bqhd,bkhd->bhqk", q, k) * scale
    a = jax.nn.softmax(s, axis=-1)
    attn = jnp.einsum("bhqk,bkhd->bqhd", a, v).reshape(b, f, d)
    h = h + attn @ p["wo"] + p["bo"]
    mu = jnp.mean(h, axis=-1, keepdims=True)
    var = jnp.mean((h - mu) ** 2, axis=-1, keepdims=True)
    hn = (h - mu) / jnp.sqrt(var + 1e-5) * p["ln_g"] + p["ln_b"]
    return geglu(hn, p["ff_w1"], p["ff_b1"], p["ff_w2"], p["ff_b2"])


# ----------------------------------- main --------------------------------------

if __name__ == "__main__":
    B, F, DIM, HEADS, LAYERS = 2, 8, 32, 4, 2     # dim_head = 8; decoder-style stack

    key = jax.random.PRNGKey(0)
    keys = jax.random.split(key, LAYERS + 1)
    x = jax.random.normal(keys[0], (B, F, DIM), jnp.float32)
    params = [init_params(keys[i + 1], DIM) for i in range(LAYERS)]

    ref = x
    for p in params:
        ref = ref_layer(ref, p, num_heads=HEADS)

    # f32 validation path: Newton-refined reciprocal brings tolerance back to 1e-4.
    out_f32 = jax.block_until_ready(
        action_coarse_stack_forward(x, params, num_heads=HEADS,
                                    compute_dtype=jnp.float32))
    assert out_f32.shape == (B, F, DIM)
    assert bool(jnp.all(jnp.isfinite(out_f32)))
    assert jnp.allclose(out_f32, ref, atol=1e-4, rtol=1e-4), (
        float(jnp.max(jnp.abs(out_f32 - ref))))

    # Default fast path: bf16 weight slabs + bf16 MXU operands (all TPU gens).
    out_bf16 = jax.block_until_ready(
        action_coarse_stack_forward(x, params, num_heads=HEADS))
    assert out_bf16.shape == (B, F, DIM)
    assert bool(jnp.all(jnp.isfinite(out_bf16)))
    assert jnp.allclose(out_bf16, ref, atol=3e-2, rtol=3e-2), (
        float(jnp.max(jnp.abs(out_bf16 - ref))))

    print("KERNEL_OK")
</pallas_src>

<mosaic_0001>
module attributes {stable_mosaic.version = 11 : i64} {
  func.func @action_coarse_stack_kernel(%arg0: i32, %arg1: memref<16x32xf32, #tpu.memory_space<vmem>>, %arg2: memref<1x32x768xf32, #tpu.memory_space<vmem>>, %arg3: memref<1x256x32xf32, #tpu.memory_space<vmem>>, %arg4: memref<1x8x256xf32, #tpu.memory_space<vmem>>, %arg5: memref<64x384xf32, #tpu.memory_space<vmem>>, %arg6: memref<16x32xf32, #tpu.memory_space<vmem>>, %arg7: memref<16x32xf32, #tpu.memory_space<vmem>>) attributes {dimension_semantics = [#tpu.dimension_semantics<arbitrary>], iteration_bounds = array<i64: 2>, scalar_prefetch = 0 : i64, scratch_operands = 1 : i64, tpu.core_type = #tpu.core_type<tc>, window_params = [{pipeline_mode = #tpu.pipeline_mode<synchronous>, transform_indices = @transform_0, window_bounds = array<i64: 16, 32>}, {transform_indices = @transform_1, window_bounds = array<i64: 1, 32, 768>}, {transform_indices = @transform_2, window_bounds = array<i64: 1, 256, 32>}, {transform_indices = @transform_3, window_bounds = array<i64: 1, 8, 256>}, {pipeline_mode = #tpu.pipeline_mode<synchronous>, transform_indices = @transform_4, window_bounds = array<i64: 64, 384>}, {pipeline_mode = #tpu.pipeline_mode<synchronous>, transform_indices = @transform_5, window_bounds = array<i64: 16, 32>}]} {
    %c0 = arith.constant 0 : index
    %c0_0 = arith.constant 0 : index
    %c0_1 = arith.constant 0 : index
    %0 = vector.load %arg2[%c0, %c0_0, %c0_1] : memref<1x32x768xf32, #tpu.memory_space<vmem>>, vector<1x32x256xf32>
    %1 = vector.shape_cast %0 : vector<1x32x256xf32> to vector<32x256xf32>
    %c0_2 = arith.constant 0 : index
    %c0_3 = arith.constant 0 : index
    %c256 = arith.constant 256 : index
    %2 = vector.load %arg2[%c0_2, %c0_3, %c256] : memref<1x32x768xf32, #tpu.memory_space<vmem>>, vector<1x32x256xf32>
    %3 = vector.shape_cast %2 : vector<1x32x256xf32> to vector<32x256xf32>
    %c0_4 = arith.constant 0 : index
    %c0_5 = arith.constant 0 : index
    %c512 = arith.constant 512 : index
    %4 = vector.load %arg2[%c0_4, %c0_5, %c512] : memref<1x32x768xf32, #tpu.memory_space<vmem>>, vector<1x32x128xf32>
    %5 = vector.shape_cast %4 : vector<1x32x128xf32> to vector<32x128xf32>
    %c0_6 = arith.constant 0 : index
    %c0_7 = arith.constant 0 : index
    %c640 = arith.constant 640 : index
    %6 = vector.load %arg2[%c0_6, %c0_7, %c640] : memref<1x32x768xf32, #tpu.memory_space<vmem>>, vector<1x32x32xf32>
    %7 = vector.shape_cast %6 : vector<1x32x32xf32> to vector<32x32xf32>
    %c0_8 = arith.constant 0 : index
    %c0_9 = arith.constant 0 : index
    %c0_10 = arith.constant 0 : index
    %8 = vector.load %arg3[%c0_8, %c0_9, %c0_10] : memref<1x256x32xf32, #tpu.memory_space<vmem>>, vector<1x128x32xf32>
    %9 = vector.shape_cast %8 : vector<1x128x32xf32> to vector<128x32xf32>
    %c0_11 = arith.constant 0 : index
    %c128 = arith.constant 128 : index
    %c0_12 = arith.constant 0 : index
    %10 = vector.load %arg3[%c0_11, %c128, %c0_12] : memref<1x256x32xf32, #tpu.memory_space<vmem>>, vector<1x128x32xf32>
    %11 = vector.shape_cast %10 : vector<1x128x32xf32> to vector<128x32xf32>
    %c0_13 = arith.constant 0 : index
    %c0_14 = arith.constant 0 : index
    %c0_15 = arith.constant 0 : index
    %12 = vector.load %arg4[%c0_13, %c0_14, %c0_15] : memref<1x8x256xf32, #tpu.memory_space<vmem>>, vector<1x1x256xf32>
    %13 = vector.shape_cast %12 : vector<1x1x256xf32> to vector<1x256xf32>
    %c0_16 = arith.constant 0 : index
    %c1 = arith.constant 1 : index
    %c0_17 = arith.constant 0 : index
    %14 = vector.load %arg4[%c0_16, %c1, %c0_17] : memref<1x8x256xf32, #tpu.memory_space<vmem>>, vector<1x1x256xf32>
    %15 = vector.shape_cast %14 : vector<1x1x256xf32> to vector<1x256xf32>
    %c0_18 = arith.constant 0 : index
    %c2 = arith.constant 2 : index
    %c0_19 = arith.constant 0 : index
    %16 = vector.load %arg4[%c0_18, %c2, %c0_19] : memref<1x8x256xf32, #tpu.memory_space<vmem>>, vector<1x1x32xf32>
    %17 = vector.shape_cast %16 : vector<1x1x32xf32> to vector<1x32xf32>
    %c0_20 = arith.constant 0 : index
    %c3 = arith.constant 3 : index
    %c0_21 = arith.constant 0 : index
    %18 = vector.load %arg4[%c0_20, %c3, %c0_21] : memref<1x8x256xf32, #tpu.memory_space<vmem>>, vector<1x1x32xf32>
    %19 = vector.shape_cast %18 : vector<1x1x32xf32> to vector<1x32xf32>
    %c0_22 = arith.constant 0 : index
    %c4 = arith.constant 4 : index
    %c0_23 = arith.constant 0 : index
    %20 = vector.load %arg4[%c0_22, %c4, %c0_23] : memref<1x8x256xf32, #tpu.memory_space<vmem>>, vector<1x1x32xf32>
    %21 = vector.shape_cast %20 : vector<1x1x32xf32> to vector<1x32xf32>
    %c0_24 = arith.constant 0 : index
    %c5 = arith.constant 5 : index
    %c0_25 = arith.constant 0 : index
    %22 = vector.load %arg4[%c0_24, %c5, %c0_25] : memref<1x8x256xf32, #tpu.memory_space<vmem>>, vector<1x1x32xf32>
    %23 = vector.shape_cast %22 : vector<1x1x32xf32> to vector<1x32xf32>
    %c0_26 = arith.constant 0 : index
    %c6 = arith.constant 6 : index
    %c0_27 = arith.constant 0 : index
    %24 = vector.load %arg4[%c0_26, %c6, %c0_27] : memref<1x8x256xf32, #tpu.memory_space<vmem>>, vector<1x1x32xf32>
    %25 = vector.shape_cast %24 : vector<1x1x32xf32> to vector<1x32xf32>
    %c0_28 = arith.constant 0 : index
    %c7 = arith.constant 7 : index
    %c0_29 = arith.constant 0 : index
    %26 = vector.load %arg4[%c0_28, %c7, %c0_29] : memref<1x8x256xf32, #tpu.memory_space<vmem>>, vector<1x1x128xf32>
    %27 = vector.shape_cast %26 : vector<1x1x128xf32> to vector<1x128xf32>
    %c0_30 = arith.constant 0 : index
    %c0_31 = arith.constant 0 : index
    %28 = vector.load %arg5[%c0_30, %c0_31] : memref<64x384xf32, #tpu.memory_space<vmem>>, vector<64x128xf32>
    %c0_32 = arith.constant 0 : index
    %c128_33 = arith.constant 128 : index
    %29 = vector.load %arg5[%c0_32, %c128_33] : memref<64x384xf32, #tpu.memory_space<vmem>>, vector<64x16xf32>
    %c0_34 = arith.constant 0 : index
    %c256_35 = arith.constant 256 : index
    %30 = vector.load %arg5[%c0_34, %c256_35] : memref<64x384xf32, #tpu.memory_space<vmem>>, vector<16x64xf32>
    %c16 = arith.constant 16 : index
    %c256_36 = arith.constant 256 : index
    %31 = vector.load %arg5[%c16, %c256_36] : memref<64x384xf32, #tpu.memory_space<vmem>>, vector<4x64xf32>
    %c0_i32 = arith.constant 0 : i32
    %32 = arith.cmpi eq, %arg0, %c0_i32 : i32
    %33 = arith.extui %32 : i1 to i32
    %c0_i32_37 = arith.constant 0 : i32
    %34 = arith.cmpi ne, %33, %c0_i32_37 : i32
    scf.if %34 {
      %c0_77 = arith.constant 0 : index
      %c0_78 = arith.constant 0 : index
      %180 = vector.load %arg1[%c0_77, %c0_78] : memref<16x32xf32, #tpu.memory_space<vmem>>, vector<16x32xf32>
      %c0_79 = arith.constant 0 : index
      %c0_80 = arith.constant 0 : index
      %181 = vector.load %arg7[%c0_79, %c0_80] : memref<16x32xf32, #tpu.memory_space<vmem>>, vector<16x32xf32>
      tpu.vector_store %arg7[%c0_79, %c0_80], %180 {strides = array<i32>} : memref<16x32xf32, #tpu.memory_space<vmem>>, vector<16x32xf32>,
    } else {
    }
    %c0_38 = arith.constant 0 : index
    %c0_39 = arith.constant 0 : index
    %35 = vector.load %arg7[%c0_38, %c0_39] : memref<16x32xf32, #tpu.memory_space<vmem>>, vector<16x32xf32>
    %cst = arith.constant dense<0.000000e+00> : vector<16x256xf32>
    %36 = tpu.matmul %35, %1, %cst {dimension_numbers = #tpu.dot_dimension_numbers<[1], [0], [0], [1], [0, 0, 1, 1], [], []>} : vector<16x32xf32>, vector<32x256xf32>, vector<16x256xf32> -> vector<16x256xf32>
    %37 = vector.broadcast %13 : vector<1x256xf32> to vector<16x256xf32>
    %38 = arith.addf %36, %37 : vector<16x256xf32>
    %39 = vector.extract_strided_slice %38 {offsets = [0, 0], sizes = [16, 128], strides = [1, 1]} : vector<16x256xf32> to vector<16x128xf32>
    %40 = vector.extract_strided_slice %38 {offsets = [0, 128], sizes = [16, 128], strides = [1, 1]} : vector<16x256xf32> to vector<16x128xf32>
    %cst_40 = arith.constant 5.000000e-01 : f32
    %41 = vector.broadcast %cst_40 : f32 to vector<16x128xf32>
    %42 = arith.mulf %41, %40 : vector<16x128xf32>
    %cst_41 = arith.constant 0.707106769 : f32
    %43 = vector.broadcast %cst_41 : f32 to vector<16x128xf32>
    %44 = arith.mulf %40, %43 : vector<16x128xf32>
    %45 = math.erf %44 : vector<16x128xf32>
    %cst_42 = arith.constant 1.000000e+00 : f32
    %46 = vector.broadcast %cst_42 : f32 to vector<16x128xf32>
    %47 = arith.addf %46, %45 : vector<16x128xf32>
    %48 = arith.mulf %42, %47 : vector<16x128xf32>
    %49 = arith.mulf %39, %48 : vector<16x128xf32>
    %cst_43 = arith.constant dense<0.000000e+00> : vector<16x32xf32>
    %50 = tpu.matmul %49, %9, %cst_43 {dimension_numbers = #tpu.dot_dimension_numbers<[1], [0], [0], [1], [0, 0, 1, 1], [], []>} : vector<16x128xf32>, vector<128x32xf32>, vector<16x32xf32> -> vector<16x32xf32>
    %51 = vector.broadcast %17 : vector<1x32xf32> to vector<16x32xf32>
    %52 = arith.addf %50, %51 : vector<16x32xf32>
    %cst_44 = arith.constant dense<0.000000e+00> : vector<16x128xf32>
    %53 = tpu.matmul %52, %5, %cst_44 {dimension_numbers = #tpu.dot_dimension_numbers<[1], [0], [0], [1], [0, 0, 1, 1], [], []>} : vector<16x32xf32>, vector<32x128xf32>, vector<16x128xf32> -> vector<16x128xf32>
    %54 = vector.broadcast %27 : vector<1x128xf32> to vector<16x128xf32>
    %55 = arith.addf %53, %54 : vector<16x128xf32>
    %56 = vector.extract_strided_slice %55 {offsets = [0, 0], sizes = [16, 32], strides = [1, 1]} : vector<16x128xf32> to vector<16x32xf32>
    %cst_45 = arith.constant dense<0.000000e+00> : vector<64x128xf32>
    %57 = tpu.matmul %29, %55, %cst_45 {dimension_numbers = #tpu.dot_dimension_numbers<[1], [0], [0], [1], [0, 0, 1, 1], [], []>} : vector<64x16xf32>, vector<16x128xf32>, vector<64x128xf32> -> vector<64x128xf32>
    %58 = arith.mulf %57, %28 : vector<64x128xf32>
    %59 = vector.extract_strided_slice %58 {offsets = [0, 32], sizes = [64, 32], strides = [1, 1]} : vector<64x128xf32> to vector<64x32xf32>
    %60 = vector.extract_strided_slice %58 {offsets = [0, 64], sizes = [64, 64], strides = [1, 1]} : vector<64x128xf32> to vector<64x64xf32>
    %cst_46 = arith.constant dense<0.000000e+00> : vector<16x64xf32>
    %61 = tpu.matmul %56, %59, %cst_46 {dimension_numbers = #tpu.dot_dimension_numbers<[1], [1], [0], [0], [0, 0, 1, 0], [], []>} : vector<16x32xf32>, vector<64x32xf32>, vector<16x64xf32> -> vector<16x64xf32>
    %62 = arith.addf %61, %30 : vector<16x64xf32>
    %cst_47 = arith.constant 0.000000e+00 : f32
    %63 = vector.broadcast %cst_47 : f32 to vector<16x64xf32>
    %64 = vector.extract_strided_slice %31 {offsets = [0, 0], sizes = [1, 64], strides = [1, 1]} : vector<4x64xf32> to vector<1x64xf32>
    %65 = vector.broadcast %64 : vector<1x64xf32> to vector<16x64xf32>
    %66 = arith.mulf %62, %65 : vector<16x64xf32>
    %cst_48 = arith.constant 1.000000e+00 : f32
    %67 = vector.broadcast %cst_48 : f32 to vector<1x64xf32>
    %68 = arith.subf %67, %64 : vector<1x64xf32>
    %cst_49 = arith.constant 1.000000e+30 : f32
    %69 = vector.broadcast %cst_49 : f32 to vector<1x64xf32>
    %70 = arith.mulf %68, %69 : vector<1x64xf32>
    %71 = vector.broadcast %70 : vector<1x64xf32> to vector<16x64xf32>
    %72 = arith.subf %66, %71 : vector<16x64xf32>
    %cst_50 = arith.constant dense<0xFF800000> : vector<16xf32>
    %73 = vector.multi_reduction <maximumf>, %72, %cst_50 [1] : vector<16x64xf32> to vector<16xf32>
    %74 = vector.shape_cast %73 : vector<16xf32> to vector<16x1xf32>
    %75 = vector.broadcast %64 : vector<1x64xf32> to vector<16x64xf32>
    %76 = vector.broadcast %74 : vector<16x1xf32> to vector<16x64xf32>
    %77 = arith.mulf %75, %76 : vector<16x64xf32>
    %78 = arith.addf %63, %77 : vector<16x64xf32>
    %79 = vector.extract_strided_slice %31 {offsets = [1, 0], sizes = [1, 64], strides = [1, 1]} : vector<4x64xf32> to vector<1x64xf32>
    %80 = vector.broadcast %79 : vector<1x64xf32> to vector<16x64xf32>
    %81 = arith.mulf %62, %80 : vector<16x64xf32>
    %cst_51 = arith.constant 1.000000e+00 : f32
    %82 = vector.broadcast %cst_51 : f32 to vector<1x64xf32>
    %83 = arith.subf %82, %79 : vector<1x64xf32>
    %cst_52 = arith.constant 1.000000e+30 : f32
    %84 = vector.broadcast %cst_52 : f32 to vector<1x64xf32>
    %85 = arith.mulf %83, %84 : vector<1x64xf32>
    %86 = vector.broadcast %85 : vector<1x64xf32> to vector<16x64xf32>
    %87 = arith.subf %81, %86 : vector<16x64xf32>
    %cst_53 = arith.constant dense<0xFF800000> : vector<16xf32>
    %88 = vector.multi_reduction <maximumf>, %87, %cst_53 [1] : vector<16x64xf32> to vector<16xf32>
    %89 = vector.shape_cast %88 : vector<16xf32> to vector<16x1xf32>
    %90 = vector.broadcast %79 : vector<1x64xf32> to vector<16x64xf32>
    %91 = vector.broadcast %89 : vector<16x1xf32> to vector<16x64xf32>
    %92 = arith.mulf %90, %91 : vector<16x64xf32>
    %93 = arith.addf %78, %92 : vector<16x64xf32>
    %94 = vector.extract_strided_slice %31 {offsets = [2, 0], sizes = [1, 64], strides = [1, 1]} : vector<4x64xf32> to vector<1x64xf32>
    %95 = vector.broadcast %94 : vector<1x64xf32> to vector<16x64xf32>
    %96 = arith.mulf %62, %95 : vector<16x64xf32>
    %cst_54 = arith.constant 1.000000e+00 : f32
    %97 = vector.broadcast %cst_54 : f32 to vector<1x64xf32>
    %98 = arith.subf %97, %94 : vector<1x64xf32>
    %cst_55 = arith.constant 1.000000e+30 : f32
    %99 = vector.broadcast %cst_55 : f32 to vector<1x64xf32>
    %100 = arith.mulf %98, %99 : vector<1x64xf32>
    %101 = vector.broadcast %100 : vector<1x64xf32> to vector<16x64xf32>
    %102 = arith.subf %96, %101 : vector<16x64xf32>
    %cst_56 = arith.constant dense<0xFF800000> : vector<16xf32>
    %103 = vector.multi_reduction <maximumf>, %102, %cst_56 [1] : vector<16x64xf32> to vector<16xf32>
    %104 = vector.shape_cast %103 : vector<16xf32> to vector<16x1xf32>
    %105 = vector.broadcast %94 : vector<1x64xf32> to vector<16x64xf32>
    %106 = vector.broadcast %104 : vector<16x1xf32> to vector<16x64xf32>
    %107 = arith.mulf %105, %106 : vector<16x64xf32>
    %108 = arith.addf %93, %107 : vector<16x64xf32>
    %109 = vector.extract_strided_slice %31 {offsets = [3, 0], sizes = [1, 64], strides = [1, 1]} : vector<4x64xf32> to vector<1x64xf32>
    %110 = vector.broadcast %109 : vector<1x64xf32> to vector<16x64xf32>
    %111 = arith.mulf %62, %110 : vector<16x64xf32>
    %cst_57 = arith.constant 1.000000e+00 : f32
    %112 = vector.broadcast %cst_57 : f32 to vector<1x64xf32>
    %113 = arith.subf %112, %109 : vector<1x64xf32>
    %cst_58 = arith.constant 1.000000e+30 : f32
    %114 = vector.broadcast %cst_58 : f32 to vector<1x64xf32>
    %115 = arith.mulf %113, %114 : vector<1x64xf32>
    %116 = vector.broadcast %115 : vector<1x64xf32> to vector<16x64xf32>
    %117 = arith.subf %111, %116 : vector<16x64xf32>
    %cst_59 = arith.constant dense<0xFF800000> : vector<16xf32>
    %118 = vector.multi_reduction <maximumf>, %117, %cst_59 [1] : vector<16x64xf32> to vector<16xf32>
    %119 = vector.shape_cast %118 : vector<16xf32> to vector<16x1xf32>
    %120 = vector.broadcast %109 : vector<1x64xf32> to vector<16x64xf32>
    %121 = vector.broadcast %119 : vector<16x1xf32> to vector<16x64xf32>
    %122 = arith.mulf %120, %121 : vector<16x64xf32>
    %123 = arith.addf %108, %122 : vector<16x64xf32>
    %124 = arith.subf %62, %123 : vector<16x64xf32>
    %125 = math.exp %124 : vector<16x64xf32>
    %cst_60 = arith.constant dense<0.000000e+00> : vector<16x64xf32>
    %126 = tpu.matmul %125, %60, %cst_60 {dimension_numbers = #tpu.dot_dimension_numbers<[1], [0], [0], [1], [0, 0, 1, 1], [], []>} : vector<16x64xf32>, vector<64x64xf32>, vector<16x64xf32> -> vector<16x64xf32>
    %127 = vector.extract_strided_slice %126 {offsets = [0, 32], sizes = [16, 32], strides = [1, 1]} : vector<16x64xf32> to vector<16x32xf32>
    %128 = tpu.reciprocal %127 {approx = true} : vector<16x32xf32> -> vector<16x32xf32>
    %129 = arith.mulf %127, %128 : vector<16x32xf32>
    %cst_61 = arith.constant 2.000000e+00 : f32
    %130 = vector.broadcast %cst_61 : f32 to vector<16x32xf32>
    %131 = arith.subf %130, %129 : vector<16x32xf32>
    %132 = arith.mulf %128, %131 : vector<16x32xf32>
    %133 = vector.extract_strided_slice %126 {offsets = [0, 0], sizes = [16, 32], strides = [1, 1]} : vector<16x64xf32> to vector<16x32xf32>
    %134 = arith.mulf %133, %132 : vector<16x32xf32>
    %cst_62 = arith.constant dense<0.000000e+00> : vector<16x32xf32>
    %135 = tpu.matmul %134, %7, %cst_62 {dimension_numbers = #tpu.dot_dimension_numbers<[1], [0], [0], [1], [0, 0, 1, 1], [], []>} : vector<16x32xf32>, vector<32x32xf32>, vector<16x32xf32> -> vector<16x32xf32>
    %136 = arith.addf %52, %135 : vector<16x32xf32>
    %137 = vector.broadcast %19 : vector<1x32xf32> to vector<16x32xf32>
    %138 = arith.addf %136, %137 : vector<16x32xf32>
    %cst_63 = arith.constant dense<0.000000e+00> : vector<16xf32>
    %139 = vector.multi_reduction <add>, %138, %cst_63 [1] : vector<16x32xf32> to vector<16xf32>
    %140 = vector.shape_cast %139 : vector<16xf32> to vector<16x1xf32>
    %cst_64 = arith.constant 3.200000e+01 : f32
    %141 = vector.broadcast %cst_64 : f32 to vector<16x1xf32>
    %142 = arith.divf %140, %141 : vector<16x1xf32>
    %143 = vector.broadcast %142 : vector<16x1xf32> to vector<16x32xf32>
    %144 = arith.subf %138, %143 : vector<16x32xf32>
    %145 = arith.mulf %144, %144 : vector<16x32xf32>
    %cst_65 = arith.constant dense<0.000000e+00> : vector<16xf32>
    %146 = vector.multi_reduction <add>, %145, %cst_65 [1] : vector<16x32xf32> to vector<16xf32>
    %147 = vector.shape_cast %146 : vector<16xf32> to vector<16x1xf32>
    %cst_66 = arith.constant 3.200000e+01 : f32
    %148 = vector.broadcast %cst_66 : f32 to vector<16x1xf32>
    %149 = arith.divf %147, %148 : vector<16x1xf32>
    %150 = vector.broadcast %142 : vector<16x1xf32> to vector<16x32xf32>
    %151 = arith.subf %138, %150 : vector<16x32xf32>
    %cst_67 = arith.constant 9.99999974E-6 : f32
    %152 = vector.broadcast %cst_67 : f32 to vector<16x1xf32>
    %153 = arith.addf %149, %152 : vector<16x1xf32>
    %154 = math.rsqrt %153 : vector<16x1xf32>
    %155 = vector.broadcast %154 : vector<16x1xf32> to vector<16x32xf32>
    %156 = arith.mulf %151, %155 : vector<16x32xf32>
    %157 = vector.broadcast %21 : vector<1x32xf32> to vector<16x32xf32>
    %158 = arith.mulf %156, %157 : vector<16x32xf32>
    %159 = vector.broadcast %23 : vector<1x32xf32> to vector<16x32xf32>
    %160 = arith.addf %158, %159 : vector<16x32xf32>
    %cst_68 = arith.constant dense<0.000000e+00> : vector<16x256xf32>
    %161 = tpu.matmul %160, %3, %cst_68 {dimension_numbers = #tpu.dot_dimension_numbers<[1], [0], [0], [1], [0, 0, 1, 1], [], []>} : vector<16x32xf32>, vector<32x256xf32>, vector<16x256xf32> -> vector<16x256xf32>
    %162 = vector.broadcast %15 : vector<1x256xf32> to vector<16x256xf32>
    %163 = arith.addf %161, %162 : vector<16x256xf32>
    %164 = vector.extract_strided_slice %163 {offsets = [0, 0], sizes = [16, 128], strides = [1, 1]} : vector<16x256xf32> to vector<16x128xf32>
    %165 = vector.extract_strided_slice %163 {offsets = [0, 128], sizes = [16, 128], strides = [1, 1]} : vector<16x256xf32> to vector<16x128xf32>
    %cst_69 = arith.constant 5.000000e-01 : f32
    %166 = vector.broadcast %cst_69 : f32 to vector<16x128xf32>
    %167 = arith.mulf %166, %165 : vector<16x128xf32>
    %cst_70 = arith.constant 0.707106769 : f32
    %168 = vector.broadcast %cst_70 : f32 to vector<16x128xf32>
    %169 = arith.mulf %165, %168 : vector<16x128xf32>
    %170 = math.erf %169 : vector<16x128xf32>
    %cst_71 = arith.constant 1.000000e+00 : f32
    %171 = vector.broadcast %cst_71 : f32 to vector<16x128xf32>
    %172 = arith.addf %171, %170 : vector<16x128xf32>
    %173 = arith.mulf %167, %172 : vector<16x128xf32>
    %174 = arith.mulf %164, %173 : vector<16x128xf32>
    %cst_72 = arith.constant dense<0.000000e+00> : vector<16x32xf32>
    %175 = tpu.matmul %174, %11, %cst_72 {dimension_numbers = #tpu.dot_dimension_numbers<[1], [0], [0], [1], [0, 0, 1, 1], [], []>} : vector<16x128xf32>, vector<128x32xf32>, vector<16x32xf32> -> vector<16x32xf32>
    %176 = vector.broadcast %25 : vector<1x32xf32> to vector<16x32xf32>
    %177 = arith.addf %175, %176 : vector<16x32xf32>
    %c0_73 = arith.constant 0 : index
    %c0_74 = arith.constant 0 : index
    %178 = vector.load %arg7[%c0_73, %c0_74] : memref<16x32xf32, #tpu.memory_space<vmem>>, vector<16x32xf32>
    tpu.vector_store %arg7[%c0_73, %c0_74], %177 {strides = array<i32>} : memref<16x32xf32, #tpu.memory_space<vmem>>, vector<16x32xf32>,
    %c0_75 = arith.constant 0 : index
    %c0_76 = arith.constant 0 : index
    %179 = vector.load %arg6[%c0_75, %c0_76] : memref<16x32xf32, #tpu.memory_space<vmem>>, vector<16x32xf32>
    tpu.vector_store %arg6[%c0_75, %c0_76], %177 {strides = array<i32>} : memref<16x32xf32, #tpu.memory_space<vmem>>, vector<16x32xf32>,
    return
  }
  func.func @transform_0(%arg0: i32) -> (i32, i32) {
    %c0_i32 = arith.constant 0 : i32
    %c0_i32_0 = arith.constant 0 : i32
    %c0_i32_1 = arith.constant 0 : i32
    return %c0_i32, %c0_i32_0 : i32, i32
  }
  func.func @transform_1(%arg0: i32) -> (i32, i32, i32) {
    %c0_i32 = arith.constant 0 : i32
    %c0_i32_0 = arith.constant 0 : i32
    %c0_i32_1 = arith.constant 0 : i32
    return %arg0, %c0_i32, %c0_i32_0 : i32, i32, i32
  }
  func.func @transform_2(%arg0: i32) -> (i32, i32, i32) {
    %c0_i32 = arith.constant 0 : i32
    %c0_i32_0 = arith.constant 0 : i32
    %c0_i32_1 = arith.constant 0 : i32
    return %arg0, %c0_i32, %c0_i32_0 : i32, i32, i32
  }
  func.func @transform_3(%arg0: i32) -> (i32, i32, i32) {
    %c0_i32 = arith.constant 0 : i32
    %c0_i32_0 = arith.constant 0 : i32
    %c0_i32_1 = arith.constant 0 : i32
    return %arg0, %c0_i32, %c0_i32_0 : i32, i32, i32
  }
  func.func @transform_4(%arg0: i32) -> (i32, i32) {
    %c0_i32 = arith.constant 0 : i32
    %c0_i32_0 = arith.constant 0 : i32
    %c0_i32_1 = arith.constant 0 : i32
    return %c0_i32, %c0_i32_0 : i32, i32
  }
  func.func @transform_5(%arg0: i32) -> (i32, i32) {
    %c0_i32 = arith.constant 0 : i32
    %c0_i32_0 = arith.constant 0 : i32
    %c0_i32_1 = arith.constant 0 : i32
    return %c0_i32, %c0_i32_0 : i32, i32
  }
}

</mosaic_0001>

<llo_original>
// kernel: tpu_custom_call.1
$region0: #{tpu_custom_call.1}
  #allocation0 [shape = 'u32[]', space=smem, size = 0x4, offset = 0x4, fixed_abs, tag = 'smem constant byte address 0x4 - core index']
  #allocation1 [shape = 'u32[144,128]{1,0:T(1,128)}', space=vmem, size = 0x12000, scoped, tag = 'internal scratch']
  #allocation2 [shape = 'f32[16,32]{1,0:T(8,128)}', space=vmem, size = 0x2000, scoped, tag = 'scratch operand']
  %s0 = inlined_call_operand.vmem [shape: f32[16,32], index: 0, kind: input, shape index: {}]
  %s1 = inlined_call_operand.vmem [shape: f32[2,32,768], index: 1, kind: input, shape index: {}]
  %s2 = inlined_call_operand.vmem [shape: f32[2,256,32], index: 2, kind: input, shape index: {}]
  %s3 = inlined_call_operand.vmem [shape: f32[2,8,256], index: 3, kind: input, shape index: {}]
  %s4 = inlined_call_operand.vmem [shape: f32[64,384], index: 4, kind: input, shape index: {}]
  %s5 = inlined_call_operand.hbm [shape: f32[16,32], index: 5, kind: output, shape index: {}]
  %s6 = sld [smem:[#allocation0]]
  $region57: #{tpu_custom_call.1} parent=0
    _
  %s8 = ssub.s32 1, %s6
  %s9 = scalar_select 0, %s8, %s6
  $region1: #{tpu_custom_call.1} parent=0
    #allocation3 [shape = 'u8[8192]{0}', space=vmem, size = 0x2000, scoped, tag = 'output window, operand 0, single buffered']
    #allocation4 [shape = 's32[2]{0}', space=sflag, size = 0x8, scoped, tag = 'scoped memory for tpu_custom_call.1']
    %10 = vsyncpa [#allocation4], 0
    loop: start=0, step=1, limit=4
    $region2: #{tpu_custom_call.1} parent=1 // loop_pre_header
      _
    $region3: #{tpu_custom_call.1} parent=1 // loop_header
      %s12 = sphi 0, %s16
      %p13 = scmp.ge.s32.totalorder %s12, 4
      %s20 = sphi 0, %s20
      %s22 = sphi 0, %s20
      %s23 = sphi 0, %s22
      %s37 = sphi 0, %s23
      %s43 = sphi 0, %s45
      %s46 = sphi 0, %s43
      %s47 = sphi 0, %s46
      %s63 = sphi 0, %s47
      %s69 = sphi 0, %s71
      %s72 = sphi 0, %s69
      %s73 = sphi 0, %s72
      %s89 = sphi 0, %s73
      %s95 = sphi 0, %s97
      %s98 = sphi 0, %s95
      %s99 = sphi 0, %s98
      %s115 = sphi 0, %s99
      %s119 = sphi 0, %s119
      %s121 = sphi 0, %s119
      %s122 = sphi 0, %s121
      %s136 = sphi 0, %s122
      %s140 = sphi 0, %s140
      %s142 = sphi 0, %s140
      %s143 = sphi 0, %s142
      %s157 = sphi 0, %s143
    $region4: #{tpu_custom_call.1} parent=1 // loop_header_branch
      %15 = sbr.rel (%p13) target = $region8
    $region5: #{tpu_custom_call.1} parent=1 // loop_body
      %s17 = ssub.s32 %s12, 1
      %s18 = ssub.s32 %s12, 2
      %s19 = sadd.s32 %s12, 1
      %s21 = sadd.s32 %s20, 1
      %p24 = scmp.eq.s32.totalorder %s12, 1
      %p25 = scmp.ne.s32.totalorder %s20, %s22
      %p26 = scmp.eq.s32.totalorder %s12, 0
      %p27 = por %p25, %p26
      %p28 = scmp.ne.s32.totalorder %s20, %s22
      %p29 = scmp.eq.s32.totalorder %s17, 1
      %p30 = por %p28, %p29
      %p31 = scmp.ne.s32.totalorder %s22, %s23
      %p32 = scmp.eq.s32.totalorder %s17, 0
      %p33 = por %p31, %p32
      %p34 = scmp.ne.s32.totalorder %s22, %s23
      %p35 = scmp.eq.s32.totalorder %s18, 1
      %p36 = por %p34, %p35
      %p38 = scmp.ne.s32.totalorder %s23, %s37
      %p39 = scmp.eq.s32.totalorder %s18, 0
      %p40 = por %p38, %p39
      %s41 = ssub.s32 %s12, %s19
      %p42 = scmp.eq.s32.totalorder %s41, 0
      %s44 = sadd.s32 %s43, 1
      %s45 = scalar_select %p42, %s43, %s44
      %p48 = pneg %p42
      %p49 = scmp.eq.s32.totalorder %s12, 1
      %p50 = por %p48, %p49
      %p51 = scmp.ne.s32.totalorder %s43, %s46
      %p52 = scmp.eq.s32.totalorder %s12, 0
      %p53 = por %p51, %p52
      %p54 = scmp.ne.s32.totalorder %s43, %s46
      %p55 = scmp.eq.s32.totalorder %s17, 1
      %p56 = por %p54, %p55
      %p57 = scmp.ne.s32.totalorder %s46, %s47
      %p58 = scmp.eq.s32.totalorder %s17, 0
      %p59 = por %p57, %p58
      %p60 = scmp.ne.s32.totalorder %s46, %s47
      %p61 = scmp.eq.s32.totalorder %s18, 1
      %p62 = por %p60, %p61
      %p64 = scmp.ne.s32.totalorder %s47, %s63
      %p65 = scmp.eq.s32.totalorder %s18, 0
      %p66 = por %p64, %p65
      %s67 = ssub.s32 %s12, %s19
      %p68 = scmp.eq.s32.totalorder %s67, 0
      %s70 = sadd.s32 %s69, 1
      %s71 = scalar_select %p68, %s69, %s70
      %p74 = pneg %p68
      %p75 = scmp.eq.s32.totalorder %s12, 1
      %p76 = por %p74, %p75
      %p77 = scmp.ne.s32.totalorder %s69, %s72
      %p78 = scmp.eq.s32.totalorder %s12, 0
      %p79 = por %p77, %p78
      %p80 = scmp.ne.s32.totalorder %s69, %s72
      %p81 = scmp.eq.s32.totalorder %s17, 1
      %p82 = por %p80, %p81
      %p83 = scmp.ne.s32.totalorder %s72, %s73
      %p84 = scmp.eq.s32.totalorder %s17, 0
      %p85 = por %p83, %p84
      %p86 = scmp.ne.s32.totalorder %s72, %s73
      %p87 = scmp.eq.s32.totalorder %s18, 1
      %p88 = por %p86, %p87
      %p90 = scmp.ne.s32.totalorder %s73, %s89
      %p91 = scmp.eq.s32.totalorder %s18, 0
      %p92 = por %p90, %p91
      %s93 = ssub.s32 %s12, %s19
      %p94 = scmp.eq.s32.totalorder %s93, 0
      %s96 = sadd.s32 %s95, 1
      %s97 = scalar_select %p94, %s95, %s96
      %p100 = pneg %p94
      %p101 = scmp.eq.s32.totalorder %s12, 1
      %p102 = por %p100, %p101
      %p103 = scmp.ne.s32.totalorder %s95, %s98
      %p104 = scmp.eq.s32.totalorder %s12, 0
      %p105 = por %p103, %p104
      %p106 = scmp.ne.s32.totalorder %s95, %s98
      %p107 = scmp.eq.s32.totalorder %s17, 1
      %p108 = por %p106, %p107
      %p109 = scmp.ne.s32.totalorder %s98, %s99
      %p110 = scmp.eq.s32.totalorder %s17, 0
      %p111 = por %p109, %p110
      %p112 = scmp.ne.s32.totalorder %s98, %s99
      %p113 = scmp.eq.s32.totalorder %s18, 1
      %p114 = por %p112, %p113
      %p116 = scmp.ne.s32.totalorder %s99, %s115
      %p117 = scmp.eq.s32.totalorder %s18, 0
      %p118 = por %p116, %p117
      %s120 = sadd.s32 %s119, 1
      %p123 = scmp.eq.s32.totalorder %s12, 1
      %p124 = scmp.ne.s32.totalorder %s119, %s121
      %p125 = scmp.eq.s32.totalorder %s12, 0
      %p126 = por %p124, %p125
      %p127 = scmp.ne.s32.totalorder %s119, %s121
      %p128 = scmp.eq.s32.totalorder %s17, 1
      %p129 = por %p127, %p128
      %p130 = scmp.ne.s32.totalorder %s121, %s122
      %p131 = scmp.eq.s32.totalorder %s17, 0
      %p132 = por %p130, %p131
      %p133 = scmp.ne.s32.totalorder %s121, %s122
      %p134 = scmp.eq.s32.totalorder %s18, 1
      %p135 = por %p133, %p134
      %p137 = scmp.ne.s32.totalorder %s122, %s136
      %p138 = scmp.eq.s32.totalorder %s18, 0
      %p139 = por %p137, %p138
      %s141 = sadd.s32 %s140, 1
      %p144 = scmp.eq.s32.totalorder %s12, 1
      %p145 = scmp.ne.s32.totalorder %s140, %s142
      %p146 = scmp.eq.s32.totalorder %s12, 0
      %p147 = por %p145, %p146
      %p148 = scmp.ne.s32.totalorder %s140, %s142
      %p149 = scmp.eq.s32.totalorder %s17, 1
      %p150 = por %p148, %p149
      %p151 = scmp.ne.s32.totalorder %s142, %s143
      %p152 = scmp.eq.s32.totalorder %s17, 0
      %p153 = por %p151, %p152
      %p154 = scmp.ne.s32.totalorder %s142, %s143
      %p155 = scmp.eq.s32.totalorder %s18, 1
      %p156 = por %p154, %p155
      %p158 = scmp.ne.s32.totalorder %s143, %s157
      %p159 = scmp.eq.s32.totalorder %s18, 0
      %p160 = por %p158, %p159
      %p161 = scmp.le.s32.totalorder 1, %s12
      %p162 = scmp.lt.s32.totalorder %s12, 3
      %p163 = pnand %p161, %p162
      %p164 = pneg %p163
      // Predicated region
      $region9: #{tpu_custom_call.1} parent=5 // pred_check
        _
      $region10: #{tpu_custom_call.1} parent=5 // pred_check_branch
        %166 = sbr.rel (%p163) target = $region12
      $region11: #{tpu_custom_call.1} parent=5 // pred_region
        %s167 = ssub.s32 %s12, 1
        // Predicated region
        $region13: #{tpu_custom_call.1} parent=11 // pred_check
          %p168 = pneg %p33
        $region14: #{tpu_custom_call.1} parent=11 // pred_check_branch
          %170 = sbr.rel (%p168) target = $region16
        $region15: #{tpu_custom_call.1} parent=11 // pred_region
          _
        $region16: #{tpu_custom_call.1} parent=11 // pred_fallthru
          _
        // Predicated region
        $region17: #{tpu_custom_call.1} parent=11 // pred_check
          %p171 = pneg %p132
        $region18: #{tpu_custom_call.1} parent=11 // pred_check_branch
          %173 = sbr.rel (%p171) target = $region20
        $region19: #{tpu_custom_call.1} parent=11 // pred_region
          _
        $region20: #{tpu_custom_call.1} parent=11 // pred_fallthru
          _
      $region12: #{tpu_custom_call.1} parent=5 // pred_fallthru
        _
      %p174 = scmp.lt.s32.totalorder %s12, 2
      // Predicated region
      $region21: #{tpu_custom_call.1} parent=5 // pred_check
        %p175 = pneg %p174
      $region22: #{tpu_custom_call.1} parent=5 // pred_check_branch
        %177 = sbr.rel (%p175) target = $region24
      $region23: #{tpu_custom_call.1} parent=5 // pred_region
        // Predicated region
        $region25: #{tpu_custom_call.1} parent=23 // pred_check
          %p178 = pneg %p53
        $region26: #{tpu_custom_call.1} parent=23 // pred_check_branch
          %180 = sbr.rel (%p178) target = $region28
        $region27: #{tpu_custom_call.1} parent=23 // pred_region
          %p181 = scmp.lt.s32.totalorder %s12, 1
          %s182 = scalar_select %p181, %s12, 1
          %s183 = smul.addr %s182, 24
          %s184 = smul.addr %s183, 8
          %s185 = scalar_lea.vmem %s1, %s184
        $region28: #{tpu_custom_call.1} parent=23 // pred_fallthru
          _
        // Predicated region
        $region29: #{tpu_custom_call.1} parent=23 // pred_check
          %p186 = pneg %p79
        $region30: #{tpu_custom_call.1} parent=23 // pred_check_branch
          %188 = sbr.rel (%p186) target = $region32
        $region31: #{tpu_custom_call.1} parent=23 // pred_region
          %p189 = scmp.lt.s32.totalorder %s12, 1
          %s190 = scalar_select %p189, %s12, 1
          %s191 = smul.addr %s190, 32
          %s192 = smul.addr %s191, 8
          %s193 = scalar_lea.vmem %s2, %s192
        $region32: #{tpu_custom_call.1} parent=23 // pred_fallthru
          _
        // Predicated region
        $region33: #{tpu_custom_call.1} parent=23 // pred_check
          %p194 = pneg %p105
        $region34: #{tpu_custom_call.1} parent=23 // pred_check_branch
          %196 = sbr.rel (%p194) target = $region36
        $region35: #{tpu_custom_call.1} parent=23 // pred_region
          %p197 = scmp.lt.s32.totalorder %s12, 1
          %s198 = scalar_select %p197, %s12, 1
          %s199 = smul.addr %s198, 2
          %s200 = smul.addr %s199, 8
          %s201 = scalar_lea.vmem %s3, %s200
        $region36: #{tpu_custom_call.1} parent=23 // pred_fallthru
          _
      $region24: #{tpu_custom_call.1} parent=5 // pred_fallthru
        _
      %p202 = scmp.le.s32.totalorder 1, %s12
      %p203 = scmp.lt.s32.totalorder %s12, 3
      %p204 = pnand %p202, %p203
      %p205 = pneg %p204
      // Predicated region
      $region37: #{tpu_custom_call.1} parent=5 // pred_check
        _
      $region38: #{tpu_custom_call.1} parent=5 // pred_check_branch
        %207 = sbr.rel (%p204) target = $region40
      $region39: #{tpu_custom_call.1} parent=5 // pred_region
        %s208 = ssub.s32 %s12, 1
        %p209 = pneg %p33
        %p210 = pneg %p30
        %p211 = scmp.lt.s32.totalorder %s17, 1
        %s212 = scalar_select %p211, %s17, 1
        %s213 = smul.addr %s212, 24
        %s214 = smul.addr %s213, 8
        %s215 = scalar_lea.vmem %s1, %s214
        %p216 = pneg %p59
        %p217 = pneg %p56
        %p218 = scmp.lt.s32.totalorder %s17, 1
        %s219 = scalar_select %p218, %s17, 1
        %s220 = smul.addr %s219, 32
        %s221 = smul.addr %s220, 8
        %s222 = scalar_lea.vmem %s2, %s221
        %p223 = pneg %p85
        %p224 = pneg %p82
        %p225 = scmp.lt.s32.totalorder %s17, 1
        %s226 = scalar_select %p225, %s17, 1
        %s227 = smul.addr %s226, 2
        %s228 = smul.addr %s227, 8
        %s229 = scalar_lea.vmem %s3, %s228
        %p230 = pneg %p111
        %p231 = pneg %p108
        %p232 = pneg %p132
        %p233 = pneg %p129
        %p234 = pneg %p153
        %p235 = pneg %p150
        %p236 = scmp.lt.s32.totalorder %s17, 1
        %s237 = scalar_select %p236, %s17, 1
        %s238 = smul.addr %s237, 24
        %s239 = smul.addr %s238, 8
        %s240 = scalar_lea.vmem %s1, %s239
        %p241 = scmp.lt.s32.totalorder %s17, 1
        %s242 = scalar_select %p241, %s17, 1
        %s243 = smul.addr %s242, 32
        %s244 = smul.addr %s243, 8
        %s245 = scalar_lea.vmem %s2, %s244
        %p246 = scmp.lt.s32.totalorder %s17, 1
        %s247 = scalar_select %p246, %s17, 1
        %s248 = smul.addr %s247, 2
        %s249 = smul.addr %s248, 8
        %s250 = scalar_lea.vmem %s3, %s249
        %v251 = vld [vmem:[%s240] sm:$0xff]
        %v252 = vld [vmem:[%s240 + $0x8] sm:$0xff]
        %v253 = vld [vmem:[%s240 + $0x30] sm:$0xff]
        %v254 = vld [vmem:[%s240 + $0x38] sm:$0xff]
        %v255 = vld [vmem:[%s240 + $0x60] sm:$0xff]
        %v256 = vld [vmem:[%s240 + $0x68] sm:$0xff]
        %v257 = vld [vmem:[%s240 + $0x90] sm:$0xff]
        %v258 = vld [vmem:[%s240 + $0x98] sm:$0xff]
        %v259 = vld [vmem:[%s240 + $0x10] sm:$0xff]
        %v260 = vld [vmem:[%s240 + $0x18] sm:$0xff]
        %v261 = vld [vmem:[%s240 + $0x40] sm:$0xff]
        %v262 = vld [vmem:[%s240 + $0x48] sm:$0xff]
        %v263 = vld [vmem:[%s240 + $0x70] sm:$0xff]
        %v264 = vld [vmem:[%s240 + $0x78] sm:$0xff]
        %v265 = vld [vmem:[%s240 + $0xa0] sm:$0xff]
        %v266 = vld [vmem:[%s240 + $0xa8] sm:$0xff]
        %v267 = vld [vmem:[%s240 + $0x20] sm:$0xff]
        %v268 = vld [vmem:[%s240 + $0x50] sm:$0xff]
        %v269 = vld [vmem:[%s240 + $0x80] sm:$0xff]
        %v270 = vld [vmem:[%s240 + $0xb0] sm:$0xff]
        %v271 = vld [vmem:[%s240 + $0x28] sm:$0xff]
        %v272 = vld [vmem:[%s240 + $0x58] sm:$0xff]
        %v273 = vld [vmem:[%s240 + $0x88] sm:$0xff]
        %v274 = vld [vmem:[%s240 + $0xb8] sm:$0xff]
        %v275 = vld [vmem:[%s245] sm:$0xff]
        %v276 = vld [vmem:[%s245 + $0x8] sm:$0xff]
        %v277 = vld [vmem:[%s245 + $0x10] sm:$0xff]
        %v278 = vld [vmem:[%s245 + $0x18] sm:$0xff]
        %v279 = vld [vmem:[%s245 + $0x20] sm:$0xff]
        %v280 = vld [vmem:[%s245 + $0x28] sm:$0xff]
        %v281 = vld [vmem:[%s245 + $0x30] sm:$0xff]
        %v282 = vld [vmem:[%s245 + $0x38] sm:$0xff]
        %v283 = vld [vmem:[%s245 + $0x40] sm:$0xff]
        %v284 = vld [vmem:[%s245 + $0x48] sm:$0xff]
        %v285 = vld [vmem:[%s245 + $0x50] sm:$0xff]
        %v286 = vld [vmem:[%s245 + $0x58] sm:$0xff]
        %v287 = vld [vmem:[%s245 + $0x60] sm:$0xff]
        %v288 = vld [vmem:[%s245 + $0x68] sm:$0xff]
        %v289 = vld [vmem:[%s245 + $0x70] sm:$0xff]
        %v290 = vld [vmem:[%s245 + $0x78] sm:$0xff]
        %v291 = vld [vmem:[%s245 + $0x80] sm:$0xff]
        %v292 = vld [vmem:[%s245 + $0x88] sm:$0xff]
        %v293 = vld [vmem:[%s245 + $0x90] sm:$0xff]
        %v294 = vld [vmem:[%s245 + $0x98] sm:$0xff]
        %v295 = vld [vmem:[%s245 + $0xa0] sm:$0xff]
        %v296 = vld [vmem:[%s245 + $0xa8] sm:$0xff]
        %v297 = vld [vmem:[%s245 + $0xb0] sm:$0xff]
        %v298 = vld [vmem:[%s245 + $0xb8] sm:$0xff]
        %v299 = vld [vmem:[%s245 + $0xc0] sm:$0xff]
        %v300 = vld [vmem:[%s245 + $0xc8] sm:$0xff]
        %v301 = vld [vmem:[%s245 + $0xd0] sm:$0xff]
        %v302 = vld [vmem:[%s245 + $0xd8] sm:$0xff]
        %v303 = vld [vmem:[%s245 + $0xe0] sm:$0xff]
        %v304 = vld [vmem:[%s245 + $0xe8] sm:$0xff]
        %v305 = vld [vmem:[%s245 + $0xf0] sm:$0xff]
        %v306 = vld [vmem:[%s245 + $0xf8] sm:$0xff]
        %v307 = vld [vmem:[%s250] ss:$8 sm:$0x3]
        %s308 = scalar_lea.vmem %s250, 1
        %v309 = vld [vmem:[%s308] ss:$8 sm:$0x3]
        %v310 = vld [vmem:[%s250 + $0x2] ss:$0 sm:$0xff]
        %v311 = vld [vmem:[%s250 + $0x3] ss:$0 sm:$0xff]
        %v312 = vld [vmem:[%s250 + $0x4] ss:$0 sm:$0xff]
        %v313 = vld [vmem:[%s250 + $0x5] ss:$0 sm:$0xff]
        %v314 = vld [vmem:[%s250 + $0x6] ss:$0 sm:$0xff]
        %v315 = vld [vmem:[%s250 + $0x7] ss:$0 sm:$0xff]
        %v316 = vld [vmem:[%s4] sm:$0xff]
        %v317 = vld [vmem:[%s4 + $0x18] sm:$0xff]
        %v318 = vld [vmem:[%s4 + $0x30] sm:$0xff]
        %v319 = vld [vmem:[%s4 + $0x48] sm:$0xff]
        %v320 = vld [vmem:[%s4 + $0x60] sm:$0xff]
        %v321 = vld [vmem:[%s4 + $0x78] sm:$0xff]
        %v322 = vld [vmem:[%s4 + $0x90] sm:$0xff]
        %v323 = vld [vmem:[%s4 + $0xa8] sm:$0xff]
        %v324 = vld [vmem:[%s4 + $0x8] sm:$0xff]
        %v325 = vld [vmem:[%s4 + $0x20] sm:$0xff]
        %v326 = vld [vmem:[%s4 + $0x38] sm:$0xff]
        %v327 = vld [vmem:[%s4 + $0x50] sm:$0xff]
        %v328 = vld [vmem:[%s4 + $0x68] sm:$0xff]
        %v329 = vld [vmem:[%s4 + $0x80] sm:$0xff]
        %v330 = vld [vmem:[%s4 + $0x98] sm:$0xff]
        %v331 = vld [vmem:[%s4 + $0xb0] sm:$0xff]
        %v332 = vld [vmem:[%s4 + $0x10] sm:$0xff]
        %v333 = vld [vmem:[%s4 + $0x28] sm:$0xff]
        %v334 = vld [vmem:[%s4 + $0x40] sm:$0xf]
        %p335 = scmp.eq.s32.totalorder %s17, 0
        // Predicated region
        $region41: #{tpu_custom_call.1} parent=39 // pred_check
          %p336 = pneg %p335
        $region42: #{tpu_custom_call.1} parent=39 // pred_check_branch
          %338 = sbr.rel (%p336) target = $region44
        $region43: #{tpu_custom_call.1} parent=39 // pred_region
          %v339 = vld [vmem:[%s0] sm:$0xff]
          %v340 = vld [vmem:[%s0 + $0x8] sm:$0xff]
          %vm341 = vcmask 261120
          %342 = vst.msk [vmem:[#allocation2] sm:$0xff] %vm341, %v339
          %343 = vst.msk [vmem:[#allocation2 + $0x8] sm:$0xff] %vm341, %v340
        $region44: #{tpu_custom_call.1} parent=39 // pred_fallthru
          _
        %v344 = vld [vmem:[#allocation2] sm:$0xff]
        %v345 = vld [vmem:[#allocation2 + $0x8] sm:$0xff]
        %v347 = vlaneseq
        %v348 = vshrl.u32 %v347, 7
        %v349 = vsub.s32 0, %v348
        %v350 = vrot.slane %v307, %v349
        %v351 = vlaneseq
        %v352 = vshrl.u32 %v351, 7
        %v353 = vsub.s32 1, %v352
        %v354 = vrot.slane %v307, %v353
        %vm357 = vcmask 261120
        %v359 = vsel %vm357, %v344, 0
        %v362 = vsel %vm357, %v345, 0
        %364 = vmatprep.subr.mxu0 %v252
        %365 = vmatpush1.msra.mxu0 %v251
        %366 = vmatprep.subr.mxu0 %v254
        %367 = vmatpush1.msra.mxu0 %v253
        %368 = vmatprep.subr.mxu0 %v256
        %369 = vmatpush1.msra.mxu0 %v255
        %370 = vmatprep.subr.mxu0 %v258
        %371 = vmatpush1.msra.mxu0 %v257
        %372 = vmatprep.subr.mxu0 0.0
        %373 = vmatpush1.msra.mxu0 0.0
        %374 = vmatprep.subr.mxu0 0.0
        %375 = vmatpush1.msra.mxu0 0.0
        %376 = vmatprep.subr.mxu0 0.0
        %377 = vmatpush1.msra.mxu0 0.0
        %378 = vmatprep.subr.mxu0 0.0
        %379 = vmatpush1.msra.mxu0 0.0
        %380 = vmatprep.subr.mxu0 0.0
        %381 = vmatpush1.msra.mxu0 0.0
        %382 = vmatprep.subr.mxu0 0.0
        %383 = vmatpush1.msra.mxu0 0.0
        %384 = vmatprep.subr.mxu0 0.0
        %385 = vmatpush1.msra.mxu0 0.0
        %386 = vmatprep.subr.mxu0 0.0
        %387 = vmatpush1.msra.mxu0 0.0
        %388 = vmatprep.subr.mxu0 0.0
        %389 = vmatpush1.msra.mxu0 0.0
        %390 = vmatprep.subr.mxu0 0.0
        %391 = vmatpush1.msra.mxu0 0.0
        %392 = vmatprep.subr.mxu0 0.0
        %393 = vmatpush1.msra.mxu0 0.0
        %394 = vmatprep.subr.mxu0 0.0
        %395 = vmatpush1.msra.mxu0 0.0
        %396 = vmatprep.subr.mxu0 0.0
        %397 = vmatpush1.msra.mxu0 0.0
        %398 = vmatprep.subr.mxu0 0.0
        %399 = vmatpush1.msra.mxu0 0.0
        %400 = vmatprep.subr.mxu0 0.0
        %401 = vmatpush1.msra.mxu0 0.0
        %402 = vmatprep.subr.mxu0 0.0
        %403 = vmatpush1.msra.mxu0 0.0
        %404 = vmatprep.subr.mxu0 0.0
        %405 = vmatpush1.msra.mxu0 0.0
        %406 = vmatprep.subr.mxu0 0.0
        %407 = vmatpush1.msra.mxu0 0.0
        %408 = vmatprep.subr.mxu0 0.0
        %409 = vmatpush1.msra.mxu0 0.0
        %410 = vmatprep.subr.mxu0 0.0
        %411 = vmatpush1.msra.mxu0 0.0
        %412 = vmatprep.subr.mxu0 0.0
        %413 = vmatpush1.msra.mxu0 0.0
        %414 = vmatprep.subr.mxu0 0.0
        %415 = vmatpush1.msra.mxu0 0.0
        %416 = vmatprep.subr.mxu0 0.0
        %417 = vmatpush1.msra.mxu0 0.0
        %418 = vmatprep.subr.mxu0 0.0
        %419 = vmatpush1.msra.mxu0 0.0
        %420 = vmatprep.subr.mxu0 0.0
        %421 = vmatpush1.msra.mxu0 0.0
        %422 = vmatprep.subr.mxu0 0.0
        %423 = vmatpush1.msra.mxu0 0.0
        %424 = vmatprep.subr.mxu0 0.0
        %425 = vmatpush1.msra.mxu0 0.0
        %426 = vmatprep.subr.mxu0 0.0
        %427 = vmatpush1.msra.mxu0 0.0
        %428 = vmatprep.mubr.f32.mxu0 0.0
        %429 = vmatmul.mubr.f32.gmra.mrb[0].mxu0 %v359
        %v430 = vpop.f32.mrb[0].mxu0
        %v431 = vadd.f32 %v350, %v430
        %v432 = vpop.f32.mrb[0].mxu0
        %v433 = vadd.f32 %v354, %v432
        %434 = vmatprep.mubr.f32.mxu0 0.0
        %435 = vmatmul.mubr.f32.gmra.mrb[0].mxu0 %v362
        %v436 = vpop.f32.mrb[0].mxu0
        %v437 = vadd.f32 %v350, %v436
        %v438 = vpop.f32.mrb[0].mxu0
        %v439 = vadd.f32 %v354, %v438
        %440 = vdwg.mxu0
        %v441 = vmul.f32 %v433, 0.5
        %v442 = vmul.f32 %v439, 0.5
        %v443 = vmul.f32 %v433, 0.70710677
        %v444 = vmul.f32 %v439, 0.70710677
        %v445 = verf.f32.pop %v443
        %v446 = verf.f32.pop %v444
        %v447 = vadd.f32 %v445, 1.0
        %v448 = vadd.f32 %v446, 1.0
        %v449 = vmul.f32 %v441, %v447
        %v450 = vmul.f32 %v442, %v448
        %v451 = vmul.f32 %v431, %v449
        %v452 = vmul.f32 %v437, %v450
        %453 = vmatprep.subr.mxu0 0.0
        %454 = vmatpush1.msra.mxu0 %v275
        %455 = vmatprep.subr.mxu0 0.0
        %456 = vmatpush1.msra.mxu0 %v276
        %457 = vmatprep.subr.mxu0 0.0
        %458 = vmatpush1.msra.mxu0 %v277
        %459 = vmatprep.subr.mxu0 0.0
        %460 = vmatpush1.msra.mxu0 %v278
        %461 = vmatprep.subr.mxu0 0.0
        %462 = vmatpush1.msra.mxu0 %v279
        %463 = vmatprep.subr.mxu0 0.0
        %464 = vmatpush1.msra.mxu0 %v280
        %465 = vmatprep.subr.mxu0 0.0
        %466 = vmatpush1.msra.mxu0 %v281
        %467 = vmatprep.subr.mxu0 0.0
        %468 = vmatpush1.msra.mxu0 %v282
        %469 = vmatprep.subr.mxu0 0.0
        %470 = vmatpush1.msra.mxu0 %v283
        %471 = vmatprep.subr.mxu0 0.0
        %472 = vmatpush1.msra.mxu0 %v284
        %473 = vmatprep.subr.mxu0 0.0
        %474 = vmatpush1.msra.mxu0 %v285
        %475 = vmatprep.subr.mxu0 0.0
        %476 = vmatpush1.msra.mxu0 %v286
        %477 = vmatprep.subr.mxu0 0.0
        %478 = vmatpush1.msra.mxu0 %v287
        %479 = vmatprep.subr.mxu0 0.0
        %480 = vmatpush1.msra.mxu0 %v288
        %481 = vmatprep.subr.mxu0 0.0
        %482 = vmatpush1.msra.mxu0 %v289
        %483 = vmatprep.subr.mxu0 0.0
        %484 = vmatpush1.msra.mxu0 %v290
        %485 = vmatprep.subr.mxu0 0.0
        %486 = vmatpush1.msra.mxu0 0.0
        %487 = vmatprep.subr.mxu0 0.0
        %488 = vmatpush1.msra.mxu0 0.0
        %489 = vmatprep.subr.mxu0 0.0
        %490 = vmatpush1.msra.mxu0 0.0
        %491 = vmatprep.subr.mxu0 0.0
        %492 = vmatpush1.msra.mxu0 0.0
        %493 = vmatprep.subr.mxu0 0.0
        %494 = vmatpush1.msra.mxu0 0.0
        %495 = vmatprep.subr.mxu0 0.0
        %496 = vmatpush1.msra.mxu0 0.0
        %497 = vmatprep.subr.mxu0 0.0
        %498 = vmatpush1.msra.mxu0 0.0
        %499 = vmatprep.subr.mxu0 0.0
        %500 = vmatpush1.msra.mxu0 0.0
        %501 = vmatprep.subr.mxu0 0.0
        %502 = vmatpush1.msra.mxu0 0.0
        %503 = vmatprep.subr.mxu0 0.0
        %504 = vmatpush1.msra.mxu0 0.0
        %505 = vmatprep.subr.mxu0 0.0
        %506 = vmatpush1.msra.mxu0 0.0
        %507 = vmatprep.subr.mxu0 0.0
        %508 = vmatpush1.msra.mxu0 0.0
        %509 = vmatprep.subr.mxu0 0.0
        %510 = vmatpush1.msra.mxu0 0.0
        %511 = vmatprep.subr.mxu0 0.0
        %512 = vmatpush1.msra.mxu0 0.0
        %513 = vmatprep.subr.mxu0 0.0
        %514 = vmatpush1.msra.mxu0 0.0
        %515 = vmatprep.subr.mxu0 0.0
        %516 = vmatpush1.msra.mxu0 0.0
        %517 = vmatprep.mubr.f32.mxu0 0.0
        %518 = vmatmul.mubr.f32.gmra.mrb[0].mxu0 %v451
        %v519 = vpop.f32.mrb[0].mxu0
        %v520 = vadd.f32 %v310, %v519
        %v521 = vpop.f32.mrb[0].mxu0
        %522 = vmatprep.mubr.f32.mxu0 0.0
        %523 = vmatmul.mubr.f32.gmra.mrb[0].mxu0 %v452
        %v524 = vpop.f32.mrb[0].mxu0
        %v525 = vadd.f32 %v310, %v524
        %v526 = vpop.f32.mrb[0].mxu0
        %527 = vdwg.mxu0
        %v529 = vsel %vm357, %v520, 0
        %v532 = vsel %vm357, %v525, 0
        %534 = vmatprep.subr.mxu0 0.0
        %535 = vmatpush1.msra.mxu0 %v267
        %536 = vmatprep.subr.mxu0 0.0
        %537 = vmatpush1.msra.mxu0 %v268
        %538 = vmatprep.subr.mxu0 0.0
        %539 = vmatpush1.msra.mxu0 %v269
        %540 = vmatprep.subr.mxu0 0.0
        %541 = vmatpush1.msra.mxu0 %v270
        %542 = vmatprep.subr.mxu0 0.0
        %543 = vmatpush1.msra.mxu0 0.0
        %544 = vmatprep.subr.mxu0 0.0
        %545 = vmatpush1.msra.mxu0 0.0
        %546 = vmatprep.subr.mxu0 0.0
        %547 = vmatpush1.msra.mxu0 0.0
        %548 = vmatprep.subr.mxu0 0.0
        %549 = vmatpush1.msra.mxu0 0.0
        %550 = vmatprep.subr.mxu0 0.0
        %551 = vmatpush1.msra.mxu0 0.0
        %552 = vmatprep.subr.mxu0 0.0
        %553 = vmatpush1.msra.mxu0 0.0
        %554 = vmatprep.subr.mxu0 0.0
        %555 = vmatpush1.msra.mxu0 0.0
        %556 = vmatprep.subr.mxu0 0.0
        %557 = vmatpush1.msra.mxu0 0.0
        %558 = vmatprep.subr.mxu0 0.0
        %559 = vmatpush1.msra.mxu0 0.0
        %560 = vmatprep.subr.mxu0 0.0
        %561 = vmatpush1.msra.mxu0 0.0
        %562 = vmatprep.subr.mxu0 0.0
        %563 = vmatpush1.msra.mxu0 0.0
        %564 = vmatprep.subr.mxu0 0.0
        %565 = vmatpush1.msra.mxu0 0.0
        %566 = vmatprep.subr.mxu0 0.0
        %567 = vmatpush1.msra.mxu0 0.0
        %568 = vmatprep.subr.mxu0 0.0
        %569 = vmatpush1.msra.mxu0 0.0
        %570 = vmatprep.subr.mxu0 0.0
        %571 = vmatpush1.msra.mxu0 0.0
        %572 = vmatprep.subr.mxu0 0.0
        %573 = vmatpush1.msra.mxu0 0.0
        %574 = vmatprep.subr.mxu0 0.0
        %575 = vmatpush1.msra.mxu0 0.0
        %576 = vmatprep.subr.mxu0 0.0
        %577 = vmatpush1.msra.mxu0 0.0
        %578 = vmatprep.subr.mxu0 0.0
        %579 = vmatpush1.msra.mxu0 0.0
        %580 = vmatprep.subr.mxu0 0.0
        %581 = vmatpush1.msra.mxu0 0.0
        %582 = vmatprep.subr.mxu0 0.0
        %583 = vmatpush1.msra.mxu0 0.0
        %584 = vmatprep.subr.mxu0 0.0
        %585 = vmatpush1.msra.mxu0 0.0
        %586 = vmatprep.subr.mxu0 0.0
        %587 = vmatpush1.msra.mxu0 0.0
        %588 = vmatprep.subr.mxu0 0.0
        %589 = vmatpush1.msra.mxu0 0.0
        %590 = vmatprep.subr.mxu0 0.0
        %591 = vmatpush1.msra.mxu0 0.0
        %592 = vmatprep.subr.mxu0 0.0
        %593 = vmatpush1.msra.mxu0 0.0
        %594 = vmatprep.subr.mxu0 0.0
        %595 = vmatpush1.msra.mxu0 0.0
        %596 = vmatprep.subr.mxu0 0.0
        %597 = vmatpush1.msra.mxu0 0.0
        %598 = vmatprep.mubr.f32.mxu0 0.0
        %599 = vmatmul.mubr.f32.gmra.mrb[0].mxu0 %v529
        %v600 = vpop.f32.mrb[0].mxu0
        %v601 = vadd.f32 %v315, %v600
        %v602 = vpop.f32.mrb[0].mxu0
        %603 = vmatprep.mubr.f32.mxu0 0.0
        %604 = vmatmul.mubr.f32.gmra.mrb[0].mxu0 %v532
        %v605 = vpop.f32.mrb[0].mxu0
        %v606 = vadd.f32 %v315, %v605
        %v607 = vpop.f32.mrb[0].mxu0
        %608 = vdwg.mxu0
        %vm609 = vcmask 130048
        %v611 = vsel %vm609, %v324, 0
        %v614 = vsel %vm609, %v325, 0
        %v617 = vsel %vm609, %v326, 0
        %v620 = vsel %vm609, %v327, 0
        %v623 = vsel %vm609, %v328, 0
        %v626 = vsel %vm609, %v329, 0
        %v629 = vsel %vm609, %v330, 0
        %v632 = vsel %vm609, %v331, 0
        %634 = vmatprep.subr.mxu0 0.0
        %635 = vmatpush1.msra.mxu0 %v601
        %636 = vmatprep.subr.mxu0 0.0
        %637 = vmatpush1.msra.mxu0 %v606
        %638 = vmatprep.subr.mxu0 0.0
        %639 = vmatpush1.msra.mxu0 0.0
        %640 = vmatprep.subr.mxu0 0.0
        %641 = vmatpush1.msra.mxu0 0.0
        %642 = vmatprep.subr.mxu0 0.0
        %643 = vmatpush1.msra.mxu0 0.0
        %644 = vmatprep.subr.mxu0 0.0
        %645 = vmatpush1.msra.mxu0 0.0
        %646 = vmatprep.subr.mxu0 0.0
        %647 = vmatpush1.msra.mxu0 0.0
        %648 = vmatprep.subr.mxu0 0.0
        %649 = vmatpush1.msra.mxu0 0.0
        %650 = vmatprep.subr.mxu0 0.0
        %651 = vmatpush1.msra.mxu0 0.0
        %652 = vmatprep.subr.mxu0 0.0
        %653 = vmatpush1.msra.mxu0 0.0
        %654 = vmatprep.subr.mxu0 0.0
        %655 = vmatpush1.msra.mxu0 0.0
        %656 = vmatprep.subr.mxu0 0.0
        %657 = vmatpush1.msra.mxu0 0.0
        %658 = vmatprep.subr.mxu0 0.0
        %659 = vmatpush1.msra.mxu0 0.0
        %660 = vmatprep.subr.mxu0 0.0
        %661 = vmatpush1.msra.mxu0 0.0
        %662 = vmatprep.subr.mxu0 0.0
        %663 = vmatpush1.msra.mxu0 0.0
        %664 = vmatprep.subr.mxu0 0.0
        %665 = vmatpush1.msra.mxu0 0.0
        %666 = vmatprep.subr.mxu0 0.0
        %667 = vmatpush1.msra.mxu0 0.0
        %668 = vmatprep.subr.mxu0 0.0
        %669 = vmatpush1.msra.mxu0 0.0
        %670 = vmatprep.subr.mxu0 0.0
        %671 = vmatpush1.msra.mxu0 0.0
        %672 = vmatprep.subr.mxu0 0.0
        %673 = vmatpush1.msra.mxu0 0.0
        %674 = vmatprep.subr.mxu0 0.0
        %675 = vmatpush1.msra.mxu0 0.0
        %676 = vmatprep.subr.mxu0 0.0
        %677 = vmatpush1.msra.mxu0 0.0
        %678 = vmatprep.subr.mxu0 0.0
        %679 = vmatpush1.msra.mxu0 0.0
        %680 = vmatprep.subr.mxu0 0.0
        %681 = vmatpush1.msra.mxu0 0.0
        %682 = vmatprep.subr.mxu0 0.0
        %683 = vmatpush1.msra.mxu0 0.0
        %684 = vmatprep.subr.mxu0 0.0
        %685 = vmatpush1.msra.mxu0 0.0
        %686 = vmatprep.subr.mxu0 0.0
        %687 = vmatpush1.msra.mxu0 0.0
        %688 = vmatprep.subr.mxu0 0.0
        %689 = vmatpush1.msra.mxu0 0.0
        %690 = vmatprep.subr.mxu0 0.0
        %691 = vmatpush1.msra.mxu0 0.0
        %692 = vmatprep.subr.mxu0 0.0
        %693 = vmatpush1.msra.mxu0 0.0
        %694 = vmatprep.subr.mxu0 0.0
        %695 = vmatpush1.msra.mxu0 0.0
        %696 = vmatprep.subr.mxu0 0.0
        %697 = vmatpush1.msra.mxu0 0.0
        %698 = vmatprep.mubr.f32.mxu0 0.0
        %699 = vmatmul.mubr.f32.gmra.mrb[0].mxu0 %v611
        %v700 = vpop.f32.mrb[0].mxu0
        %v701 = vadd.f32 0.0, %v700
        %v702 = vpop.f32.mrb[0].mxu0
        %703 = vmatprep.mubr.f32.mxu0 0.0
        %704 = vmatmul.mubr.f32.gmra.mrb[0].mxu0 %v614
        %v705 = vpop.f32.mrb[0].mxu0
        %v706 = vadd.f32 0.0, %v705
        %v707 = vpop.f32.mrb[0].mxu0
        %708 = vmatprep.mubr.f32.mxu0 0.0
        %709 = vmatmul.mubr.f32.gmra.mrb[0].mxu0 %v617
        %v710 = vpop.f32.mrb[0].mxu0
        %v711 = vadd.f32 0.0, %v710
        %v712 = vpop.f32.mrb[0].mxu0
        %713 = vmatprep.mubr.f32.mxu0 0.0
        %714 = vmatmul.mubr.f32.gmra.mrb[0].mxu0 %v620
        %v715 = vpop.f32.mrb[0].mxu0
        %v716 = vadd.f32 0.0, %v715
        %v717 = vpop.f32.mrb[0].mxu0
        %718 = vmatprep.mubr.f32.mxu0 0.0
        %719 = vmatmul.mubr.f32.gmra.mrb[0].mxu0 %v623
        %v720 = vpop.f32.mrb[0].mxu0
        %v721 = vadd.f32 0.0, %v720
        %v722 = vpop.f32.mrb[0].mxu0
        %723 = vmatprep.mubr.f32.mxu0 0.0
        %724 = vmatmul.mubr.f32.gmra.mrb[0].mxu0 %v626
        %v725 = vpop.f32.mrb[0].mxu0
        %v726 = vadd.f32 0.0, %v725
        %v727 = vpop.f32.mrb[0].mxu0
        %728 = vmatprep.mubr.f32.mxu0 0.0
        %729 = vmatmul.mubr.f32.gmra.mrb[0].mxu0 %v629
        %v730 = vpop.f32.mrb[0].mxu0
        %v731 = vadd.f32 0.0, %v730
        %v732 = vpop.f32.mrb[0].mxu0
        %733 = vmatprep.mubr.f32.mxu0 0.0
        %734 = vmatmul.mubr.f32.gmra.mrb[0].mxu0 %v632
        %v735 = vpop.f32.mrb[0].mxu0
        %v736 = vadd.f32 0.0, %v735
        %v737 = vpop.f32.mrb[0].mxu0
        %738 = vdwg.mxu0
        %v739 = vmul.f32 %v701, %v316
        %v740 = vmul.f32 %v706, %v317
        %v741 = vmul.f32 %v711, %v318
        %v742 = vmul.f32 %v716, %v319
        %v743 = vmul.f32 %v721, %v320
        %v744 = vmul.f32 %v726, %v321
        %v745 = vmul.f32 %v731, %v322
        %v746 = vmul.f32 %v736, %v323
        %755 = vrot.lane.b32.xlu0 %v739, 96
        %v756 = vpop.permute.xlu0 %755
        %757 = vrot.lane.b32.xlu0 %v740, 96
        %v758 = vpop.permute.xlu0 %757
        %759 = vrot.lane.b32.xlu0 %v741, 96
        %v760 = vpop.permute.xlu0 %759
        %761 = vrot.lane.b32.xlu0 %v742, 96
        %v762 = vpop.permute.xlu0 %761
        %763 = vrot.lane.b32.xlu0 %v743, 96
        %v764 = vpop.permute.xlu0 %763
        %765 = vrot.lane.b32.xlu0 %v744, 96
        %v766 = vpop.permute.xlu0 %765
        %767 = vrot.lane.b32.xlu0 %v745, 96
        %v768 = vpop.permute.xlu0 %767
        %769 = vrot.lane.b32.xlu0 %v746, 96
        %v770 = vpop.permute.xlu0 %769
        %v772 = vsel %vm357, %v601, 0
        %v775 = vsel %vm357, %v606, 0
        %v777 = vsel %vm357, %v756, 0
        %v779 = vsel %vm357, %v758, 0
        %v781 = vsel %vm357, %v760, 0
        %v783 = vsel %vm357, %v762, 0
        %v785 = vsel %vm357, %v764, 0
        %v787 = vsel %vm357, %v766, 0
        %v789 = vsel %vm357, %v768, 0
        %v791 = vsel %vm357, %v770, 0
        %793 = vmatprep.subr.mxu0 0.0
        %794 = vmatpush1.xpose.msra.mxu0 %v777
        %795 = vmatprep.subr.mxu0 0.0
        %796 = vmatpush1.xpose.msra.mxu0 %v779
        %797 = vmatprep.subr.mxu0 0.0
        %798 = vmatpush1.xpose.msra.mxu0 %v781
        %799 = vmatprep.subr.mxu0 0.0
        %800 = vmatpush1.xpose.msra.mxu0 %v783
        %801 = vmatprep.subr.mxu0 0.0
        %802 = vmatpush1.xpose.msra.mxu0 %v785
        %803 = vmatprep.subr.mxu0 0.0
        %804 = vmatpush1.xpose.msra.mxu0 %v787
        %805 = vmatprep.subr.mxu0 0.0
        %806 = vmatpush1.xpose.msra.mxu0 %v789
        %807 = vmatprep.subr.mxu0 0.0
        %808 = vmatpush1.xpose.msra.mxu0 %v791
        %809 = vmatprep.subr.mxu0 0.0
        %810 = vmatpush1.xpose.msra.mxu0 0.0
        %811 = vmatprep.subr.mxu0 0.0
        %812 = vmatpush1.xpose.msra.mxu0 0.0
        %813 = vmatprep.subr.mxu0 0.0
        %814 = vmatpush1.xpose.msra.mxu0 0.0
        %815 = vmatprep.subr.mxu0 0.0
        %816 = vmatpush1.xpose.msra.mxu0 0.0
        %817 = vmatprep.subr.mxu0 0.0
        %818 = vmatpush1.xpose.msra.mxu0 0.0
        %819 = vmatprep.subr.mxu0 0.0
        %820 = vmatpush1.xpose.msra.mxu0 0.0
        %821 = vmatprep.subr.mxu0 0.0
        %822 = vmatpush1.xpose.msra.mxu0 0.0
        %823 = vmatprep.subr.mxu0 0.0
        %824 = vmatpush1.xpose.msra.mxu0 0.0
        %825 = vmatprep.subr.mxu0 0.0
        %826 = vmatpush1.xpose.msra.mxu0 0.0
        %827 = vmatprep.subr.mxu0 0.0
        %828 = vmatpush1.xpose.msra.mxu0 0.0
        %829 = vmatprep.subr.mxu0 0.0
        %830 = vmatpush1.xpose.msra.mxu0 0.0
        %831 = vmatprep.subr.mxu0 0.0
        %832 = vmatpush1.xpose.msra.mxu0 0.0
        %833 = vmatprep.subr.mxu0 0.0
        %834 = vmatpush1.xpose.msra.mxu0 0.0
        %835 = vmatprep.subr.mxu0 0.0
        %836 = vmatpush1.xpose.msra.mxu0 0.0
        %837 = vmatprep.subr.mxu0 0.0
        %838 = vmatpush1.xpose.msra.mxu0 0.0
        %839 = vmatprep.subr.mxu0 0.0
        %840 = vmatpush1.xpose.msra.mxu0 0.0
        %841 = vmatprep.subr.mxu0 0.0
        %842 = vmatpush1.xpose.msra.mxu0 0.0
        %843 = vmatprep.subr.mxu0 0.0
        %844 = vmatpush1.xpose.msra.mxu0 0.0
        %845 = vmatprep.subr.mxu0 0.0
        %846 = vmatpush1.xpose.msra.mxu0 0.0
        %847 = vmatprep.subr.mxu0 0.0
        %848 = vmatpush1.xpose.msra.mxu0 0.0
        %849 = vmatprep.subr.mxu0 0.0
        %850 = vmatpush1.xpose.msra.mxu0 0.0
        %851 = vmatprep.subr.mxu0 0.0
        %852 = vmatpush1.xpose.msra.mxu0 0.0
        %853 = vmatprep.subr.mxu0 0.0
        %854 = vmatpush1.xpose.msra.mxu0 0.0
        %855 = vmatprep.subr.mxu0 0.0
        %856 = vmatpush1.xpose.msra.mxu0 0.0
        %857 = vmatprep.mubr.f32.mxu0 0.0
        %858 = vmatmul.mubr.f32.gmra.mrb[0].mxu0 %v772
        %v859 = vpop.f32.mrb[0].mxu0
        %v860 = vadd.f32 %v332, %v859
        %v861 = vpop.f32.mrb[0].mxu0
        %862 = vmatprep.mubr.f32.mxu0 0.0
        %863 = vmatmul.mubr.f32.gmra.mrb[0].mxu0 %v775
        %v864 = vpop.f32.mrb[0].mxu0
        %v865 = vadd.f32 %v333, %v864
        %v866 = vpop.f32.mrb[0].mxu0
        %867 = vdwg.mxu0
        %v868 = vlaneseq
        %v869 = vshrl.u32 %v868, 7
        %v870 = vsub.s32 0, %v869
        %v871 = vrot.slane %v334, %v870
        %v872 = vmul.f32 %v860, %v871
        %v873 = vmul.f32 %v865, %v871
        %v874 = vsub.f32 1.0, %v334
        %v875 = vmul.f32 %v874, 1e+30
        %v876 = vlaneseq
        %v877 = vshrl.u32 %v876, 7
        %v878 = vsub.s32 0, %v877
        %v879 = vrot.slane %v875, %v878
        %v880 = vsub.f32 %v872, %v879
        %v881 = vsub.f32 %v873, %v879
        %vm882 = vcmask 523264
        %v883 = vsel %vm882, %v880, -inf
        %884 = vmax.xlane.f32.xlu0 %v883
        %v885 = vpop.xlane.xlu0 %884
        %v886 = vsel %vm882, %v881, -inf
        %887 = vmax.xlane.f32.xlu0 %v886
        %v888 = vpop.xlane.xlu0 %887
        %v889 = vmul.f32 %v871, %v885
        %v890 = vmul.f32 %v871, %v888
        %v891 = vadd.f32 %v889, 0.0
        %v892 = vadd.f32 %v890, 0.0
        %v893 = vlaneseq
        %v894 = vshrl.u32 %v893, 7
        %v895 = vsub.s32 1, %v894
        %v896 = vrot.slane %v334, %v895
        %v897 = vmul.f32 %v860, %v896
        %v898 = vmul.f32 %v865, %v896
        %v899 = vlaneseq
        %v900 = vshrl.u32 %v899, 7
        %v901 = vsub.s32 1, %v900
        %v902 = vrot.slane %v875, %v901
        %v903 = vsub.f32 %v897, %v902
        %v904 = vsub.f32 %v898, %v902
        %v905 = vsel %vm882, %v903, -inf
        %906 = vmax.xlane.f32.xlu0 %v905
        %v907 = vpop.xlane.xlu0 %906
        %v908 = vsel %vm882, %v904, -inf
        %909 = vmax.xlane.f32.xlu0 %v908
        %v910 = vpop.xlane.xlu0 %909
        %v911 = vmul.f32 %v896, %v907
        %v912 = vmul.f32 %v896, %v910
        %v913 = vadd.f32 %v891, %v911
        %v914 = vadd.f32 %v892, %v912
        %v915 = vlaneseq
        %v916 = vshrl.u32 %v915, 7
        %v917 = vsub.s32 2, %v916
        %v918 = vrot.slane %v334, %v917
        %v919 = vmul.f32 %v860, %v918
        %v920 = vmul.f32 %v865, %v918
        %v921 = vlaneseq
        %v922 = vshrl.u32 %v921, 7
        %v923 = vsub.s32 2, %v922
        %v924 = vrot.slane %v875, %v923
        %v925 = vsub.f32 %v919, %v924
        %v926 = vsub.f32 %v920, %v924
        %v927 = vsel %vm882, %v925, -inf
        %928 = vmax.xlane.f32.xlu0 %v927
        %v929 = vpop.xlane.xlu0 %928
        %v930 = vsel %vm882, %v926, -inf
        %931 = vmax.xlane.f32.xlu0 %v930
        %v932 = vpop.xlane.xlu0 %931
        %v933 = vmul.f32 %v918, %v929
        %v934 = vmul.f32 %v918, %v932
        %v935 = vadd.f32 %v913, %v933
        %v936 = vadd.f32 %v914, %v934
        %v937 = vlaneseq
        %v938 = vshrl.u32 %v937, 7
        %v939 = vsub.s32 3, %v938
        %v940 = vrot.slane %v334, %v939
        %v941 = vmul.f32 %v860, %v940
        %v942 = vmul.f32 %v865, %v940
        %v943 = vlaneseq
        %v944 = vshrl.u32 %v943, 7
        %v945 = vsub.s32 3, %v944
        %v946 = vrot.slane %v875, %v945
        %v947 = vsub.f32 %v941, %v946
        %v948 = vsub.f32 %v942, %v946
        %v949 = vsel %vm882, %v947, -inf
        %950 = vmax.xlane.f32.xlu0 %v949
        %v951 = vpop.xlane.xlu0 %950
        %v952 = vsel %vm882, %v948, -inf
        %953 = vmax.xlane.f32.xlu0 %v952
        %v954 = vpop.xlane.xlu0 %953
        %v955 = vmul.f32 %v940, %v951
        %v956 = vmul.f32 %v940, %v954
        %v957 = vadd.f32 %v935, %v955
        %v958 = vadd.f32 %v936, %v956
        %v959 = vsub.f32 %v860, %v957
        %v960 = vsub.f32 %v865, %v958
        %v961 = vmul.f32 %v959, 1.442695
        %v962 = vpow.pop %v961
        %v963 = vmul.f32 %v960, 1.442695
        %v964 = vpow.pop %v963
        %965 = vrot.lane.b32.xlu0 %v739, 64
        %v966 = vpop.permute.xlu0 %965
        %967 = vrot.lane.b32.xlu0 %v740, 64
        %v968 = vpop.permute.xlu0 %967
        %969 = vrot.lane.b32.xlu0 %v741, 64
        %v970 = vpop.permute.xlu0 %969
        %971 = vrot.lane.b32.xlu0 %v742, 64
        %v972 = vpop.permute.xlu0 %971
        %973 = vrot.lane.b32.xlu0 %v743, 64
        %v974 = vpop.permute.xlu0 %973
        %975 = vrot.lane.b32.xlu0 %v744, 64
        %v976 = vpop.permute.xlu0 %975
        %977 = vrot.lane.b32.xlu0 %v745, 64
        %v978 = vpop.permute.xlu0 %977
        %979 = vrot.lane.b32.xlu0 %v746, 64
        %v980 = vpop.permute.xlu0 %979
        %v990 = vsel %vm882, %v962, 0
        %v993 = vsel %vm882, %v964, 0
        %995 = vmatprep.subr.mxu0 0.0
        %996 = vmatpush1.msra.mxu0 %v966
        %997 = vmatprep.subr.mxu0 0.0
        %998 = vmatpush1.msra.mxu0 %v968
        %999 = vmatprep.subr.mxu0 0.0
        %1000 = vmatpush1.msra.mxu0 %v970
        %1001 = vmatprep.subr.mxu0 0.0
        %1002 = vmatpush1.msra.mxu0 %v972
        %1003 = vmatprep.subr.mxu0 0.0
        %1004 = vmatpush1.msra.mxu0 %v974
        %1005 = vmatprep.subr.mxu0 0.0
        %1006 = vmatpush1.msra.mxu0 %v976
        %1007 = vmatprep.subr.mxu0 0.0
        %1008 = vmatpush1.msra.mxu0 %v978
        %1009 = vmatprep.subr.mxu0 0.0
        %1010 = vmatpush1.msra.mxu0 %v980
        %1011 = vmatprep.subr.mxu0 0.0
        %1012 = vmatpush1.msra.mxu0 0.0
        %1013 = vmatprep.subr.mxu0 0.0
        %1014 = vmatpush1.msra.mxu0 0.0
        %1015 = vmatprep.subr.mxu0 0.0
        %1016 = vmatpush1.msra.mxu0 0.0
        %1017 = vmatprep.subr.mxu0 0.0
        %1018 = vmatpush1.msra.mxu0 0.0
        %1019 = vmatprep.subr.mxu0 0.0
        %1020 = vmatpush1.msra.mxu0 0.0
        %1021 = vmatprep.subr.mxu0 0.0
        %1022 = vmatpush1.msra.mxu0 0.0
        %1023 = vmatprep.subr.mxu0 0.0
        %1024 = vmatpush1.msra.mxu0 0.0
        %1025 = vmatprep.subr.mxu0 0.0
        %1026 = vmatpush1.msra.mxu0 0.0
        %1027 = vmatprep.subr.mxu0 0.0
        %1028 = vmatpush1.msra.mxu0 0.0
        %1029 = vmatprep.subr.mxu0 0.0
        %1030 = vmatpush1.msra.mxu0 0.0
        %1031 = vmatprep.subr.mxu0 0.0
        %1032 = vmatpush1.msra.mxu0 0.0
        %1033 = vmatprep.subr.mxu0 0.0
        %1034 = vmatpush1.msra.mxu0 0.0
        %1035 = vmatprep.subr.mxu0 0.0
        %1036 = vmatpush1.msra.mxu0 0.0
        %1037 = vmatprep.subr.mxu0 0.0
        %1038 = vmatpush1.msra.mxu0 0.0
        %1039 = vmatprep.subr.mxu0 0.0
        %1040 = vmatpush1.msra.mxu0 0.0
        %1041 = vmatprep.subr.mxu0 0.0
        %1042 = vmatpush1.msra.mxu0 0.0
        %1043 = vmatprep.subr.mxu0 0.0
        %1044 = vmatpush1.msra.mxu0 0.0
        %1045 = vmatprep.subr.mxu0 0.0
        %1046 = vmatpush1.msra.mxu0 0.0
        %1047 = vmatprep.subr.mxu0 0.0
        %1048 = vmatpush1.msra.mxu0 0.0
        %1049 = vmatprep.subr.mxu0 0.0
        %1050 = vmatpush1.msra.mxu0 0.0
        %1051 = vmatprep.subr.mxu0 0.0
        %1052 = vmatpush1.msra.mxu0 0.0
        %1053 = vmatprep.subr.mxu0 0.0
        %1054 = vmatpush1.msra.mxu0 0.0
        %1055 = vmatprep.subr.mxu0 0.0
        %1056 = vmatpush1.msra.mxu0 0.0
        %1057 = vmatprep.subr.mxu0 0.0
        %1058 = vmatpush1.msra.mxu0 0.0
        %1059 = vmatprep.mubr.f32.mxu0 0.0
        %1060 = vmatmul.mubr.f32.gmra.mrb[0].mxu0 %v990
        %v1061 = vpop.f32.mrb[0].mxu0
        %v1062 = vadd.f32 0.0, %v1061
        %v1063 = vpop.f32.mrb[0].mxu0
        %1064 = vmatprep.mubr.f32.mxu0 0.0
        %1065 = vmatmul.mubr.f32.gmra.mrb[0].mxu0 %v993
        %v1066 = vpop.f32.mrb[0].mxu0
        %v1067 = vadd.f32 0.0, %v1066
        %v1068 = vpop.f32.mrb[0].mxu0
        %1069 = vdwg.mxu0
        %v1070 = vrcp.pop %v1062
        %v1071 = vrcp.pop %v1067
        %v1072 = vmul.f32 %v1062, %v1070
        %v1073 = vmul.f32 %v1067, %v1071
        %v1074 = vsub.f32 2.0, %v1072
        %v1075 = vsub.f32 2.0, %v1073
        %v1076 = vmul.f32 %v1070, %v1074
        %v1077 = vmul.f32 %v1071, %v1075
        %1080 = vrot.lane.b32.xlu0 %v1076, 96
        %v1081 = vpop.permute.xlu0 %1080
        %1082 = vrot.lane.b32.xlu0 %v1077, 96
        %v1083 = vpop.permute.xlu0 %1082
        %v1086 = vmul.f32 %v1062, %v1081
        %v1087 = vmul.f32 %v1067, %v1083
        %v1089 = vsel %vm357, %v1086, 0
        %v1092 = vsel %vm357, %v1087, 0
        %1094 = vmatprep.subr.mxu0 0.0
        %1095 = vmatpush1.msra.mxu0 %v271
        %1096 = vmatprep.subr.mxu0 0.0
        %1097 = vmatpush1.msra.mxu0 %v272
        %1098 = vmatprep.subr.mxu0 0.0
        %1099 = vmatpush1.msra.mxu0 %v273
        %1100 = vmatprep.subr.mxu0 0.0
        %1101 = vmatpush1.msra.mxu0 %v274
        %1102 = vmatprep.subr.mxu0 0.0
        %1103 = vmatpush1.msra.mxu0 0.0
        %1104 = vmatprep.subr.mxu0 0.0
        %1105 = vmatpush1.msra.mxu0 0.0
        %1106 = vmatprep.subr.mxu0 0.0
        %1107 = vmatpush1.msra.mxu0 0.0
        %1108 = vmatprep.subr.mxu0 0.0
        %1109 = vmatpush1.msra.mxu0 0.0
        %1110 = vmatprep.subr.mxu0 0.0
        %1111 = vmatpush1.msra.mxu0 0.0
        %1112 = vmatprep.subr.mxu0 0.0
        %1113 = vmatpush1.msra.mxu0 0.0
        %1114 = vmatprep.subr.mxu0 0.0
        %1115 = vmatpush1.msra.mxu0 0.0
        %1116 = vmatprep.subr.mxu0 0.0
        %1117 = vmatpush1.msra.mxu0 0.0
        %1118 = vmatprep.subr.mxu0 0.0
        %1119 = vmatpush1.msra.mxu0 0.0
        %1120 = vmatprep.subr.mxu0 0.0
        %1121 = vmatpush1.msra.mxu0 0.0
        %1122 = vmatprep.subr.mxu0 0.0
        %1123 = vmatpush1.msra.mxu0 0.0
        %1124 = vmatprep.subr.mxu0 0.0
        %1125 = vmatpush1.msra.mxu0 0.0
        %1126 = vmatprep.subr.mxu0 0.0
        %1127 = vmatpush1.msra.mxu0 0.0
        %1128 = vmatprep.subr.mxu0 0.0
        %1129 = vmatpush1.msra.mxu0 0.0
        %1130 = vmatprep.subr.mxu0 0.0
        %1131 = vmatpush1.msra.mxu0 0.0
        %1132 = vmatprep.subr.mxu0 0.0
        %1133 = vmatpush1.msra.mxu0 0.0
        %1134 = vmatprep.subr.mxu0 0.0
        %1135 = vmatpush1.msra.mxu0 0.0
        %1136 = vmatprep.subr.mxu0 0.0
        %1137 = vmatpush1.msra.mxu0 0.0
        %1138 = vmatprep.subr.mxu0 0.0
        %1139 = vmatpush1.msra.mxu0 0.0
        %1140 = vmatprep.subr.mxu0 0.0
        %1141 = vmatpush1.msra.mxu0 0.0
        %1142 = vmatprep.subr.mxu0 0.0
        %1143 = vmatpush1.msra.mxu0 0.0
        %1144 = vmatprep.subr.mxu0 0.0
        %1145 = vmatpush1.msra.mxu0 0.0
        %1146 = vmatprep.subr.mxu0 0.0
        %1147 = vmatpush1.msra.mxu0 0.0
        %1148 = vmatprep.subr.mxu0 0.0
        %1149 = vmatpush1.msra.mxu0 0.0
        %1150 = vmatprep.subr.mxu0 0.0
        %1151 = vmatpush1.msra.mxu0 0.0
        %1152 = vmatprep.subr.mxu0 0.0
        %1153 = vmatpush1.msra.mxu0 0.0
        %1154 = vmatprep.subr.mxu0 0.0
        %1155 = vmatpush1.msra.mxu0 0.0
        %1156 = vmatprep.subr.mxu0 0.0
        %1157 = vmatpush1.msra.mxu0 0.0
        %1158 = vmatprep.mubr.f32.mxu0 0.0
        %1159 = vmatmul.mubr.f32.gmra.mrb[0].mxu0 %v1089
        %v1160 = vpop.f32.mrb[0].mxu0
        %v1161 = vadd.f32 0.0, %v1160
        %v1162 = vpop.f32.mrb[0].mxu0
        %1163 = vmatprep.mubr.f32.mxu0 0.0
        %1164 = vmatmul.mubr.f32.gmra.mrb[0].mxu0 %v1092
        %v1165 = vpop.f32.mrb[0].mxu0
        %v1166 = vadd.f32 0.0, %v1165
        %v1167 = vpop.f32.mrb[0].mxu0
        %1168 = vdwg.mxu0
        %v1169 = vadd.f32 %v520, %v1161
        %v1170 = vadd.f32 %v525, %v1166
        %v1171 = vadd.f32 %v1169, %v311
        %v1172 = vadd.f32 %v1170, %v311
        %v1173 = vsel %vm357, %v1171, 0.0
        %1174 = vadd.xlane.f32.xlu0 %v1173
        %v1175 = vpop.xlane.xlu0 %1174
        %v1176 = vsel %vm357, %v1172, 0.0
        %1177 = vadd.xlane.f32.xlu0 %v1176
        %v1178 = vpop.xlane.xlu0 %1177
        %v1179 = vrcp.pop 32.0
        %v1180 = vmul.f32 %v1175, %v1179
        %v1181 = vmul.f32 %v1178, %v1179
        %v1182 = vsub.f32 %v1171, %v1180
        %v1183 = vsub.f32 %v1172, %v1181
        %v1184 = vmul.f32 %v1182, %v1182
        %v1185 = vmul.f32 %v1183, %v1183
        %v1186 = vsel %vm357, %v1184, 0.0
        %1187 = vadd.xlane.f32.xlu0 %v1186
        %v1188 = vpop.xlane.xlu0 %1187
        %v1189 = vsel %vm357, %v1185, 0.0
        %1190 = vadd.xlane.f32.xlu0 %v1189
        %v1191 = vpop.xlane.xlu0 %1190
        %v1192 = vmul.f32 %v1188, %v1179
        %v1193 = vmul.f32 %v1191, %v1179
        %v1194 = vadd.f32 %v1192, 1e-05
        %v1195 = vadd.f32 %v1193, 1e-05
        %v1196 = vrsqrt.pop %v1194
        %v1197 = vrsqrt.pop %v1195
        %v1198 = vmul.f32 %v1182, %v1196
        %v1199 = vmul.f32 %v1183, %v1197
        %v1200 = vmul.f32 %v1198, %v312
        %v1201 = vmul.f32 %v1199, %v312
        %v1202 = vadd.f32 %v1200, %v313
        %v1203 = vadd.f32 %v1201, %v313
        %v1205 = vlaneseq
        %v1206 = vshrl.u32 %v1205, 7
        %v1207 = vsub.s32 0, %v1206
        %v1208 = vrot.slane %v309, %v1207
        %v1209 = vlaneseq
        %v1210 = vshrl.u32 %v1209, 7
        %v1211 = vsub.s32 1, %v1210
        %v1212 = vrot.slane %v309, %v1211
        %v1216 = vsel %vm357, %v1202, 0
        %v1219 = vsel %vm357, %v1203, 0
        %1221 = vmatprep.subr.mxu0 %v260
        %1222 = vmatpush1.msra.mxu0 %v259
        %1223 = vmatprep.subr.mxu0 %v262
        %1224 = vmatpush1.msra.mxu0 %v261
        %1225 = vmatprep.subr.mxu0 %v264
        %1226 = vmatpush1.msra.mxu0 %v263
        %1227 = vmatprep.subr.mxu0 %v266
        %1228 = vmatpush1.msra.mxu0 %v265
        %1229 = vmatprep.subr.mxu0 0.0
        %1230 = vmatpush1.msra.mxu0 0.0
        %1231 = vmatprep.subr.mxu0 0.0
        %1232 = vmatpush1.msra.mxu0 0.0
        %1233 = vmatprep.subr.mxu0 0.0
        %1234 = vmatpush1.msra.mxu0 0.0
        %1235 = vmatprep.subr.mxu0 0.0
        %1236 = vmatpush1.msra.mxu0 0.0
        %1237 = vmatprep.subr.mxu0 0.0
        %1238 = vmatpush1.msra.mxu0 0.0
        %1239 = vmatprep.subr.mxu0 0.0
        %1240 = vmatpush1.msra.mxu0 0.0
        %1241 = vmatprep.subr.mxu0 0.0
        %1242 = vmatpush1.msra.mxu0 0.0
        %1243 = vmatprep.subr.mxu0 0.0
        %1244 = vmatpush1.msra.mxu0 0.0
        %1245 = vmatprep.subr.mxu0 0.0
        %1246 = vmatpush1.msra.mxu0 0.0
        %1247 = vmatprep.subr.mxu0 0.0
        %1248 = vmatpush1.msra.mxu0 0.0
        %1249 = vmatprep.subr.mxu0 0.0
        %1250 = vmatpush1.msra.mxu0 0.0
        %1251 = vmatprep.subr.mxu0 0.0
        %1252 = vmatpush1.msra.mxu0 0.0
        %1253 = vmatprep.subr.mxu0 0.0
        %1254 = vmatpush1.msra.mxu0 0.0
        %1255 = vmatprep.subr.mxu0 0.0
        %1256 = vmatpush1.msra.mxu0 0.0
        %1257 = vmatprep.subr.mxu0 0.0
        %1258 = vmatpush1.msra.mxu0 0.0
        %1259 = vmatprep.subr.mxu0 0.0
        %1260 = vmatpush1.msra.mxu0 0.0
        %1261 = vmatprep.subr.mxu0 0.0
        %1262 = vmatpush1.msra.mxu0 0.0
        %1263 = vmatprep.subr.mxu0 0.0
        %1264 = vmatpush1.msra.mxu0 0.0
        %1265 = vmatprep.subr.mxu0 0.0
        %1266 = vmatpush1.msra.mxu0 0.0
        %1267 = vmatprep.subr.mxu0 0.0
        %1268 = vmatpush1.msra.mxu0 0.0
        %1269 = vmatprep.subr.mxu0 0.0
        %1270 = vmatpush1.msra.mxu0 0.0
        %1271 = vmatprep.subr.mxu0 0.0
        %1272 = vmatpush1.msra.mxu0 0.0
        %1273 = vmatprep.subr.mxu0 0.0
        %1274 = vmatpush1.msra.mxu0 0.0
        %1275 = vmatprep.subr.mxu0 0.0
        %1276 = vmatpush1.msra.mxu0 0.0
        %1277 = vmatprep.subr.mxu0 0.0
        %1278 = vmatpush1.msra.mxu0 0.0
        %1279 = vmatprep.subr.mxu0 0.0
        %1280 = vmatpush1.msra.mxu0 0.0
        %1281 = vmatprep.subr.mxu0 0.0
        %1282 = vmatpush1.msra.mxu0 0.0
        %1283 = vmatprep.subr.mxu0 0.0
        %1284 = vmatpush1.msra.mxu0 0.0
        %1285 = vmatprep.mubr.f32.mxu0 0.0
        %1286 = vmatmul.mubr.f32.gmra.mrb[0].mxu0 %v1216
        %v1287 = vpop.f32.mrb[0].mxu0
        %v1288 = vadd.f32 %v1208, %v1287
        %v1289 = vpop.f32.mrb[0].mxu0
        %v1290 = vadd.f32 %v1212, %v1289
        %1291 = vmatprep.mubr.f32.mxu0 0.0
        %1292 = vmatmul.mubr.f32.gmra.mrb[0].mxu0 %v1219
        %v1293 = vpop.f32.mrb[0].mxu0
        %v1294 = vadd.f32 %v1208, %v1293
        %v1295 = vpop.f32.mrb[0].mxu0
        %v1296 = vadd.f32 %v1212, %v1295
        %1297 = vdwg.mxu0
        %v1298 = vmul.f32 %v1290, 0.5
        %v1299 = vmul.f32 %v1296, 0.5
        %v1300 = vmul.f32 %v1290, 0.70710677
        %v1301 = vmul.f32 %v1296, 0.70710677
        %v1302 = verf.f32.pop %v1300
        %v1303 = verf.f32.pop %v1301
        %v1304 = vadd.f32 %v1302, 1.0
        %v1305 = vadd.f32 %v1303, 1.0
        %v1306 = vmul.f32 %v1298, %v1304
        %v1307 = vmul.f32 %v1299, %v1305
        %v1308 = vmul.f32 %v1288, %v1306
        %v1309 = vmul.f32 %v1294, %v1307
        %1310 = vmatprep.subr.mxu0 0.0
        %1311 = vmatpush1.msra.mxu0 %v291
        %1312 = vmatprep.subr.mxu0 0.0
        %1313 = vmatpush1.msra.mxu0 %v292
        %1314 = vmatprep.subr.mxu0 0.0
        %1315 = vmatpush1.msra.mxu0 %v293
        %1316 = vmatprep.subr.mxu0 0.0
        %1317 = vmatpush1.msra.mxu0 %v294
        %1318 = vmatprep.subr.mxu0 0.0
        %1319 = vmatpush1.msra.mxu0 %v295
        %1320 = vmatprep.subr.mxu0 0.0
        %1321 = vmatpush1.msra.mxu0 %v296
        %1322 = vmatprep.subr.mxu0 0.0
        %1323 = vmatpush1.msra.mxu0 %v297
        %1324 = vmatprep.subr.mxu0 0.0
        %1325 = vmatpush1.msra.mxu0 %v298
        %1326 = vmatprep.subr.mxu0 0.0
        %1327 = vmatpush1.msra.mxu0 %v299
        %1328 = vmatprep.subr.mxu0 0.0
        %1329 = vmatpush1.msra.mxu0 %v300
        %1330 = vmatprep.subr.mxu0 0.0
        %1331 = vmatpush1.msra.mxu0 %v301
        %1332 = vmatprep.subr.mxu0 0.0
        %1333 = vmatpush1.msra.mxu0 %v302
        %1334 = vmatprep.subr.mxu0 0.0
        %1335 = vmatpush1.msra.mxu0 %v303
        %1336 = vmatprep.subr.mxu0 0.0
        %1337 = vmatpush1.msra.mxu0 %v304
        %1338 = vmatprep.subr.mxu0 0.0
        %1339 = vmatpush1.msra.mxu0 %v305
        %1340 = vmatprep.subr.mxu0 0.0
        %1341 = vmatpush1.msra.mxu0 %v306
        %1342 = vmatprep.subr.mxu0 0.0
        %1343 = vmatpush1.msra.mxu0 0.0
        %1344 = vmatprep.subr.mxu0 0.0
        %1345 = vmatpush1.msra.mxu0 0.0
        %1346 = vmatprep.subr.mxu0 0.0
        %1347 = vmatpush1.msra.mxu0 0.0
        %1348 = vmatprep.subr.mxu0 0.0
        %1349 = vmatpush1.msra.mxu0 0.0
        %1350 = vmatprep.subr.mxu0 0.0
        %1351 = vmatpush1.msra.mxu0 0.0
        %1352 = vmatprep.subr.mxu0 0.0
        %1353 = vmatpush1.msra.mxu0 0.0
        %1354 = vmatprep.subr.mxu0 0.0
        %1355 = vmatpush1.msra.mxu0 0.0
        %1356 = vmatprep.subr.mxu0 0.0
        %1357 = vmatpush1.msra.mxu0 0.0
        %1358 = vmatprep.subr.mxu0 0.0
        %1359 = vmatpush1.msra.mxu0 0.0
        %1360 = vmatprep.subr.mxu0 0.0
        %1361 = vmatpush1.msra.mxu0 0.0
        %1362 = vmatprep.subr.mxu0 0.0
        %1363 = vmatpush1.msra.mxu0 0.0
        %1364 = vmatprep.subr.mxu0 0.0
        %1365 = vmatpush1.msra.mxu0 0.0
        %1366 = vmatprep.subr.mxu0 0.0
        %1367 = vmatpush1.msra.mxu0 0.0
        %1368 = vmatprep.subr.mxu0 0.0
        %1369 = vmatpush1.msra.mxu0 0.0
        %1370 = vmatprep.subr.mxu0 0.0
        %1371 = vmatpush1.msra.mxu0 0.0
        %1372 = vmatprep.subr.mxu0 0.0
        %1373 = vmatpush1.msra.mxu0 0.0
        %1374 = vmatprep.mubr.f32.mxu0 0.0
        %1375 = vmatmul.mubr.f32.gmra.mrb[0].mxu0 %v1308
        %v1376 = vpop.f32.mrb[0].mxu0
        %v1377 = vadd.f32 %v314, %v1376
        %v1378 = vpop.f32.mrb[0].mxu0
        %1379 = vmatprep.mubr.f32.mxu0 0.0
        %1380 = vmatmul.mubr.f32.gmra.mrb[0].mxu0 %v1309
        %v1381 = vpop.f32.mrb[0].mxu0
        %v1382 = vadd.f32 %v314, %v1381
        %v1383 = vpop.f32.mrb[0].mxu0
        %1384 = vdwg.mxu0
        %1385 = vst.msk [vmem:[#allocation2] sm:$0xff] %vm357, %v1377
        %1386 = vst.msk [vmem:[#allocation2 + $0x8] sm:$0xff] %vm357, %v1382
        %1387 = vst.msk [vmem:[#allocation3] sm:$0xff] %vm357, %v1377
        %1388 = vst.msk [vmem:[#allocation3 + $0x8] sm:$0xff] %vm357, %v1382
        // Predicated region
        $region45: #{tpu_custom_call.1} parent=39 // pred_check
          %p1389 = pneg %p150
        $region46: #{tpu_custom_call.1} parent=39 // pred_check_branch
          %1391 = sbr.rel (%p1389) target = $region48
        $region47: #{tpu_custom_call.1} parent=39 // pred_region
          %s1393 = ssub.s32 256, 256
          %1394 = vsyncadd [#allocation4], %s1393
          %s1395 = sshll.u32 [#allocation3], 4
          %s1396 = int_to_ptr.vmem [resolvable:$true] %s1395
          %1401 = dma.vmem_to_hbm [thread:$0]  %s1396, 256, %s5, [#allocation4], 128, 128, 8
        $region48: #{tpu_custom_call.1} parent=39 // pred_fallthru
          _
        // Predicated region
        $region49: #{tpu_custom_call.1} parent=39 // pred_check
          %p1402 = pneg %p150
        $region50: #{tpu_custom_call.1} parent=39 // pred_check_branch
          %1404 = sbr.rel (%p1402) target = $region52
        $region51: #{tpu_custom_call.1} parent=39 // pred_region
          %1405 = dma.done [#allocation4], 256
        $region52: #{tpu_custom_call.1} parent=39 // pred_fallthru
          _
      $region40: #{tpu_custom_call.1} parent=5 // pred_fallthru
        _
      %p1406 = scmp.le.s32.totalorder 2, %s12
      // Predicated region
      $region53: #{tpu_custom_call.1} parent=5 // pred_check
        %p1407 = pneg %p1406
      $region54: #{tpu_custom_call.1} parent=5 // pred_check_branch
        %1409 = sbr.rel (%p1407) target = $region56
      $region55: #{tpu_custom_call.1} parent=5 // pred_region
        %s1410 = ssub.s32 %s12, 2
      $region56: #{tpu_custom_call.1} parent=5 // pred_fallthru
        _
    $region6: #{tpu_custom_call.1} parent=1 // loop_footer
      %s16 = sadd.s32 1, %s12
    $region7: #{tpu_custom_call.1} parent=1 // loop_footer_branch
      %11 = sbr.rel target = $region3
    $region8: #{tpu_custom_call.1} parent=1 // loop_exit
      _
    %1411 = vsyncpa [#allocation4], 1
    %s1412 = scalar_lea.sflag [#allocation4], 1
    %1413 = vsyncpa %s1412, 1

</llo_original>
